<compile_context>
chip_gen: v5e
topology: v5e:2x2
jax: 0.10.0
libtpu: 0.0.40
codegen_flags: <defaults>
</compile_context>

<pallas_src>
import functools

import jax
import jax.numpy as jnp
import numpy as np
from jax import lax
from jax.experimental import pallas as pl
from jax.experimental.pallas import tpu as pltpu


def _hardswish(z):
    # PyTorch nn.Hardswish: x * relu6(x + 3) / 6
    return z * jnp.clip(z + 3.0, 0.0, 6.0) * (1.0 / 6.0)


def st_joint_att_kernel(x_ref, pool_ref, scale_ref, et_ref, ev_ref,
                        wf_ref, bf_ref, wtv_ref, btv_ref, o_ref):
    """One grid step = a block of Nb samples.  x_ref: (Nb, C, T*V), lane-dense last dim."""
    nb, c, tv = x_ref.shape
    p = pool_ref.shape[1]          # T + V
    t_len = et_ref.shape[0]        # T
    ci = wf_ref.shape[0]           # inner channels
    f32 = jnp.float32

    # 1) Pooled descriptor [sum over V | sum over T] in ONE lane-dense MXU pass over the
    #    big tensor; x is fed in its I/O dtype (no full-block f32 cast), f32 accumulation.
    x2 = x_ref[...].reshape(nb * c, tv)                               # free merge (C % 8 == 0)
    pooled = jnp.dot(x2, pool_ref[...], preferred_element_type=f32)   # (Nb*C, T+V)
    pooled = pooled * scale_ref[...]                                  # exact 1/V, 1/T in f32

    # 2) Tiny per-sample channel mixing (fcn -> conv_t/conv_v) as BATCHED matmuls with the
    #    shared weights broadcast over Nb (no O(Nb^2) block-diagonal kron weights).
    pooled3 = pooled.reshape(nb, c, p)                                # free split (C % 8 == 0)
    dn = (((2,), (1,)), ((0,), (0,)))                                 # batch dim 0, contract C/Ci
    wf_b = jnp.broadcast_to(wf_ref[...][None], (nb, ci, c))
    hid = _hardswish(lax.dot_general(wf_b, pooled3, dn, preferred_element_type=f32)
                     + bf_ref[...])                                   # (Nb, Ci, T+V)
    wtv_b = jnp.broadcast_to(wtv_ref[...][None], (nb, 2 * c, ci))
    logits = (lax.dot_general(wtv_b, hid, dn, preferred_element_type=f32)
              + btv_ref[...])                                         # (Nb, 2C, T+V): [t ; v] rows

    # 3) Contiguous row blocks (no per-sample interleaving); sigmoid only on used columns.
    t_att = jax.nn.sigmoid(logits[:, :c, :t_len]).reshape(nb * c, t_len)       # (Nb*C, T)
    v_att = jax.nn.sigmoid(logits[:, c:, t_len:]).reshape(nb * c, p - t_len)   # (Nb*C, V)

    # 4) Lane-dense expansion on the MXU (et[t, t*V+v]=1, ev[v, t*V+v]=1) + VPU product:
    #    out[nc, t*V+v] = t_att[nc, t] * v_att[nc, v]; no cross-lane reshapes on the hot tensor.
    cdt = et_ref.dtype
    t_rep = jnp.dot(t_att.astype(cdt), et_ref[...], preferred_element_type=f32)  # (Nb*C, T*V)
    v_rep = jnp.dot(v_att.astype(cdt), ev_ref[...], preferred_element_type=f32)  # (Nb*C, T*V)
    o_ref[...] = (t_rep * v_rep).reshape(nb, c, tv).astype(o_ref.dtype)


def _tpu_topology():
    """(vmem_capacity_bytes, tensorcores_per_chip) with conservative fallbacks."""
    vmem = 64 << 20          # smallest per-core VMEM across v5e/v6e/v7x
    cores = 1
    try:
        info = pltpu.get_tpu_info()
        vmem = int(getattr(info, "vmem_capacity_bytes", vmem))
        for name in ("num_cores", "num_tensorcores", "tensorcores_per_chip", "core_count"):
            val = getattr(info, name, None)
            if val:
                cores = int(val)
                break
    except Exception:
        pass
    return vmem, max(1, cores)


def _pick_block_n(n, c, tv, p, ci, itemsize, vmem_bytes, num_tc):
    """Largest divisor of n whose per-step working set fits the VMEM budget; only forces
    grid >= num_tc when more than one TensorCore is present (v7x)."""
    per_sample = (4 * c * tv * itemsize   # double-buffered input + output blocks
                  + 16 * c * tv           # in-kernel f32 expansion temporaries (t_rep/v_rep/prod)
                  + 12 * c * ci           # per-sample broadcast of the 1x1-conv weights
                  + 32 * c * p)           # pooled / hidden / logit small-chain temporaries
    budget = max(int(0.6 * vmem_bytes) - (2 << 20), per_sample)   # headroom: consts + scratch
    cap = max(1, budget // per_sample)
    if num_tc > 1:
        cap = min(cap, max(1, n // num_tc))
    best = 1
    for d in range(1, min(n, cap) + 1):
        if n % d == 0:
            best = d
    return best


@functools.lru_cache(maxsize=None)
def _constants_np(T, V):
    """Host-built 0/1 pooling / expansion matrices and the f32 mean-scale vector (cached)."""
    TV, P = T * V, T + V
    idx = np.arange(TV)
    t_idx, v_idx = idx // V, idx % V
    pool = np.zeros((TV, P), np.float32)
    pool[idx, t_idx] = 1.0              # sum over V  -> columns [0, T)
    pool[idx, T + v_idx] = 1.0          # sum over T  -> columns [T, T+V)
    scale = np.concatenate([np.full((T,), 1.0 / V, np.float32),
                            np.full((V,), 1.0 / T, np.float32)])[None, :]   # (1, T+V)
    et = np.zeros((T, TV), np.float32)
    et[t_idx, idx] = 1.0                # broadcast t_att over V
    ev = np.zeros((V, TV), np.float32)
    ev[v_idx, idx] = 1.0                # tile v_att over T
    return pool, scale, et, ev


def st_joint_att_forward(x, params, block_n=None):
    """x: (N, C, T, V).  Returns the (N, C, T, V) joint attention map (dtype follows x)."""
    N, C, T, V = x.shape
    wf, bf, wt, bt, wv, bv = params
    Ci = wf.shape[0]
    TV, P = T * V, T + V
    if C % 8 != 0:
        raise ValueError(f"C={C} must be a multiple of 8 (TPU sublane tiling); pad channels.")
    if TV % 128 != 0:
        raise ValueError(f"T*V={TV} must be a multiple of 128 (TPU lane tiling); pad T or V.")

    vmem_bytes, num_tc = _tpu_topology()
    if block_n is None:
        block_n = _pick_block_n(N, C, TV, P, Ci, x.dtype.itemsize, vmem_bytes, num_tc)
    if N % block_n != 0:
        raise ValueError(f"block_n={block_n} must divide N={N}")
    Nb = block_n

    # Lane-dense flatten: (N, C, T, V) -> (N, C, T*V); row-major layout unchanged -> free.
    x_flat = x.reshape(N, C, TV)

    # Constants: 0/1 selection matrices in the I/O dtype (exact even in bf16); the 1/V, 1/T
    # scaling stays in a small f32 vector so non-power-of-two T/V remain exact.
    cdt = jnp.bfloat16 if x.dtype == jnp.bfloat16 else jnp.float32
    pool_np, scale_np, et_np, ev_np = _constants_np(T, V)
    pool = jnp.asarray(pool_np, dtype=cdt)
    et = jnp.asarray(et_np, dtype=cdt)
    ev = jnp.asarray(ev_np, dtype=cdt)
    scale = jnp.asarray(scale_np)                                     # (1, P) f32

    f32 = jnp.float32
    wf32 = wf.astype(f32)                                             # (Ci, C)
    bf2 = bf.astype(f32).reshape(Ci, 1)                               # (Ci, 1)
    wtv = jnp.concatenate([wt, wv], axis=0).astype(f32)               # (2C, Ci): [conv_t ; conv_v]
    btv = jnp.concatenate([bt, bv], axis=0).astype(f32).reshape(2 * C, 1)

    const = lambda a: pl.BlockSpec(a.shape, lambda n: (0,) * a.ndim)  # grid-invariant operand

    out_flat = pl.pallas_call(
        st_joint_att_kernel,
        out_shape=jax.ShapeDtypeStruct((N, C, TV), x.dtype),
        grid=(N // Nb,),
        in_specs=[
            pl.BlockSpec((Nb, C, TV), lambda n: (n, 0, 0)),           # x block (lane-dense)
            const(pool), const(scale), const(et), const(ev),
            const(wf32), const(bf2), const(wtv), const(btv),
        ],
        out_specs=pl.BlockSpec((Nb, C, TV), lambda n: (n, 0, 0)),
        compiler_params=pltpu.CompilerParams(
            dimension_semantics=("parallel",),
            vmem_limit_bytes=min(int(vmem_bytes * 0.85), 127 << 20),
        ),
    )(x_flat, pool, scale, et, ev, wf32, bf2, wtv, btv)

    return out_flat.reshape(N, C, T, V)


def make_params(key, C, reduct_ratio=4, eps=1e-5):
    """Synthetic ST_Joint_Att parameters with eval-mode BN folded into the fcn conv."""
    Ci = max(C // reduct_ratio, 1)
    ks = jax.random.split(key, 10)
    f32 = jnp.float32

    # fcn: Conv2d(C, Ci, 1, bias=True) + BatchNorm2d(Ci) (eval mode, folded)
    wf_raw = 0.2 * jax.random.normal(ks[0], (Ci, C), f32)
    bf_raw = 0.1 * jax.random.normal(ks[1], (Ci,), f32)
    gamma = 1.0 + 0.1 * jax.random.normal(ks[2], (Ci,), f32)
    beta = 0.05 * jax.random.normal(ks[3], (Ci,), f32)
    r_mean = 0.01 * jax.random.normal(ks[4], (Ci,), f32)
    r_var = 1.0 + 0.1 * jnp.abs(jax.random.normal(ks[5], (Ci,), f32))
    s = gamma / jnp.sqrt(r_var + eps)
    wf = s[:, None] * wf_raw
    bf = s * (bf_raw - r_mean) + beta

    # conv_t / conv_v: Conv2d(Ci, C, 1, bias=True)
    wt = 0.2 * jax.random.normal(ks[6], (C, Ci), f32)
    bt = 0.1 * jax.random.normal(ks[7], (C,), f32)
    wv = 0.2 * jax.random.normal(ks[8], (C, Ci), f32)
    bv = 0.1 * jax.random.normal(ks[9], (C,), f32)
    return (wf, bf, wt, bt, wv, bv)


def st_joint_att_reference(x, params):
    """Pure-JAX mirror of the PyTorch forward (eval-mode BN folded into wf/bf)."""
    wf, bf, wt, bt, wv, bv = params
    x_t = jnp.mean(x, axis=3)                              # (N, C, T)
    x_v = jnp.mean(x, axis=2)                              # (N, C, V)
    ft = _hardswish(jnp.einsum('ic,nct->nit', wf, x_t) + bf[None, :, None])
    fv = _hardswish(jnp.einsum('ic,ncv->niv', wf, x_v) + bf[None, :, None])
    t_att = jax.nn.sigmoid(jnp.einsum('ci,nit->nct', wt, ft) + bt[None, :, None])
    v_att = jax.nn.sigmoid(jnp.einsum('ci,niv->ncv', wv, fv) + bv[None, :, None])
    return t_att[:, :, :, None] * v_att[:, :, None, :]     # (N, C, T, V)


if __name__ == "__main__":
    # Small demo: T*V = 256 (lane-dense), C = 16 (sublane-aligned).
    N, C, T, V = 8, 16, 16, 16
    key = jax.random.PRNGKey(0)
    kx, kp = jax.random.split(key)
    x = jax.random.normal(kx, (N, C, T, V), jnp.float32)
    params = make_params(kp, C, reduct_ratio=4)

    fwd = jax.jit(lambda xx: st_joint_att_forward(xx, params))
    out = jax.block_until_ready(fwd(x))
    ref = jax.block_until_ready(st_joint_att_reference(x, params))

    # Tolerance covers the TPU MXU's default (bf16-operand) precision for f32 matmuls,
    # which both the kernel and XLA einsums may use; logic errors would be far larger.
    np.testing.assert_allclose(np.asarray(out), np.asarray(ref), rtol=1e-2, atol=1e-2)
    print("KERNEL_OK")
</pallas_src>

<mosaic_0001>
module attributes {stable_mosaic.version = 11 : i64} {
  func.func @st_joint_att_kernel(%arg0: i32, %arg1: memref<8x16x256xf32, #tpu.memory_space<vmem>>, %arg2: memref<256x32xf32, #tpu.memory_space<vmem>>, %arg3: memref<1x32xf32, #tpu.memory_space<vmem>>, %arg4: memref<16x256xf32, #tpu.memory_space<vmem>>, %arg5: memref<16x256xf32, #tpu.memory_space<vmem>>, %arg6: memref<4x16xf32, #tpu.memory_space<vmem>>, %arg7: memref<4x1xf32, #tpu.memory_space<vmem>>, %arg8: memref<32x4xf32, #tpu.memory_space<vmem>>, %arg9: memref<32x1xf32, #tpu.memory_space<vmem>>, %arg10: memref<8x16x256xf32, #tpu.memory_space<vmem>>) attributes {dimension_semantics = [#tpu.dimension_semantics<parallel>], iteration_bounds = array<i64: 1>, scalar_prefetch = 0 : i64, scratch_operands = 0 : i64, tpu.core_type = #tpu.core_type<tc>, window_params = [{transform_indices = @transform_0, window_bounds = array<i64: 8, 16, 256>}, {pipeline_mode = #tpu.pipeline_mode<synchronous>, transform_indices = @transform_1, window_bounds = array<i64: 256, 32>}, {pipeline_mode = #tpu.pipeline_mode<synchronous>, transform_indices = @transform_2, window_bounds = array<i64: 1, 32>}, {pipeline_mode = #tpu.pipeline_mode<synchronous>, transform_indices = @transform_3, window_bounds = array<i64: 16, 256>}, {pipeline_mode = #tpu.pipeline_mode<synchronous>, transform_indices = @transform_4, window_bounds = array<i64: 16, 256>}, {pipeline_mode = #tpu.pipeline_mode<synchronous>, transform_indices = @transform_5, window_bounds = array<i64: 4, 16>}, {pipeline_mode = #tpu.pipeline_mode<synchronous>, transform_indices = @transform_6, window_bounds = array<i64: 4, 1>}, {pipeline_mode = #tpu.pipeline_mode<synchronous>, transform_indices = @transform_7, window_bounds = array<i64: 32, 4>}, {pipeline_mode = #tpu.pipeline_mode<synchronous>, transform_indices = @transform_8, window_bounds = array<i64: 32, 1>}, {transform_indices = @transform_9, window_bounds = array<i64: 8, 16, 256>}]} {
    %c0 = arith.constant 0 : index
    %c0_0 = arith.constant 0 : index
    %c0_1 = arith.constant 0 : index
    %0 = vector.load %arg1[%c0, %c0_0, %c0_1] : memref<8x16x256xf32, #tpu.memory_space<vmem>>, vector<8x16x256xf32>
    %1 = vector.shape_cast %0 : vector<8x16x256xf32> to vector<128x256xf32>
    %c0_2 = arith.constant 0 : index
    %c0_3 = arith.constant 0 : index
    %2 = vector.load %arg2[%c0_2, %c0_3] : memref<256x32xf32, #tpu.memory_space<vmem>>, vector<256x32xf32>
    %cst = arith.constant dense<0.000000e+00> : vector<128x32xf32>
    %3 = tpu.matmul %1, %2, %cst {dimension_numbers = #tpu.dot_dimension_numbers<[1], [0], [0], [1], [0, 0, 1, 1], [], []>} : vector<128x256xf32>, vector<256x32xf32>, vector<128x32xf32> -> vector<128x32xf32>
    %c0_4 = arith.constant 0 : index
    %c0_5 = arith.constant 0 : index
    %4 = vector.load %arg3[%c0_4, %c0_5] : memref<1x32xf32, #tpu.memory_space<vmem>>, vector<1x32xf32>
    %5 = vector.broadcast %4 : vector<1x32xf32> to vector<128x32xf32>
    %6 = arith.mulf %3, %5 : vector<128x32xf32>
    %7 = vector.shape_cast %6 : vector<128x32xf32> to vector<8x16x32xf32>
    %c0_6 = arith.constant 0 : index
    %c0_7 = arith.constant 0 : index
    %8 = vector.load %arg6[%c0_6, %c0_7] : memref<4x16xf32, #tpu.memory_space<vmem>>, vector<4x16xf32>
    %9 = vector.shape_cast %8 : vector<4x16xf32> to vector<1x4x16xf32>
    %10 = vector.shape_cast %9 : vector<1x4x16xf32> to vector<1x4x16xf32>
    %11 = vector.broadcast %10 : vector<1x4x16xf32> to vector<8x4x16xf32>
    %cst_8 = arith.constant dense<0.000000e+00> : vector<8x4x32xf32>
    %12 = tpu.matmul %11, %7, %cst_8 {dimension_numbers = #tpu.dot_dimension_numbers<[2], [1], [1], [2], [0, 0, 0, 1, 1, 2], [0], [0]>} : vector<8x4x16xf32>, vector<8x16x32xf32>, vector<8x4x32xf32> -> vector<8x4x32xf32>
    %c0_9 = arith.constant 0 : index
    %c0_10 = arith.constant 0 : index
    %13 = vector.load %arg7[%c0_9, %c0_10] : memref<4x1xf32, #tpu.memory_space<vmem>>, vector<4x1xf32>
    %14 = vector.shape_cast %13 : vector<4x1xf32> to vector<1x4x1xf32>
    %15 = vector.broadcast %14 : vector<1x4x1xf32> to vector<8x4x32xf32>
    %16 = arith.addf %12, %15 : vector<8x4x32xf32>
    %cst_11 = arith.constant 3.000000e+00 : f32
    %17 = vector.broadcast %cst_11 : f32 to vector<8x4x32xf32>
    %18 = arith.addf %16, %17 : vector<8x4x32xf32>
    %cst_12 = arith.constant 0.000000e+00 : f32
    %cst_13 = arith.constant 6.000000e+00 : f32
    %19 = vector.broadcast %cst_12 : f32 to vector<8x4x32xf32>
    %20 = arith.maximumf %19, %18 : vector<8x4x32xf32>
    %21 = vector.broadcast %cst_13 : f32 to vector<8x4x32xf32>
    %22 = arith.minimumf %21, %20 : vector<8x4x32xf32>
    %23 = arith.mulf %16, %22 : vector<8x4x32xf32>
    %cst_14 = arith.constant 0.166666672 : f32
    %24 = vector.broadcast %cst_14 : f32 to vector<8x4x32xf32>
    %25 = arith.mulf %23, %24 : vector<8x4x32xf32>
    %c0_15 = arith.constant 0 : index
    %c0_16 = arith.constant 0 : index
    %26 = vector.load %arg8[%c0_15, %c0_16] : memref<32x4xf32, #tpu.memory_space<vmem>>, vector<32x4xf32>
    %27 = vector.shape_cast %26 : vector<32x4xf32> to vector<1x32x4xf32>
    %28 = vector.shape_cast %27 : vector<1x32x4xf32> to vector<1x32x4xf32>
    %29 = vector.broadcast %28 : vector<1x32x4xf32> to vector<8x32x4xf32>
    %cst_17 = arith.constant dense<0.000000e+00> : vector<8x32x32xf32>
    %30 = tpu.matmul %29, %25, %cst_17 {dimension_numbers = #tpu.dot_dimension_numbers<[2], [1], [1], [2], [0, 0, 0, 1, 1, 2], [0], [0]>} : vector<8x32x4xf32>, vector<8x4x32xf32>, vector<8x32x32xf32> -> vector<8x32x32xf32>
    %c0_18 = arith.constant 0 : index
    %c0_19 = arith.constant 0 : index
    %31 = vector.load %arg9[%c0_18, %c0_19] : memref<32x1xf32, #tpu.memory_space<vmem>>, vector<32x1xf32>
    %32 = vector.shape_cast %31 : vector<32x1xf32> to vector<1x32x1xf32>
    %33 = vector.broadcast %32 : vector<1x32x1xf32> to vector<8x32x32xf32>
    %34 = arith.addf %30, %33 : vector<8x32x32xf32>
    %35 = vector.extract_strided_slice %34 {offsets = [0, 0, 0], sizes = [8, 16, 16], strides = [1, 1, 1]} : vector<8x32x32xf32> to vector<8x16x16xf32>
    %36 = arith.negf %35 : vector<8x16x16xf32>
    %37 = math.exp %36 : vector<8x16x16xf32>
    %cst_20 = arith.constant 1.000000e+00 : f32
    %38 = vector.broadcast %cst_20 : f32 to vector<8x16x16xf32>
    %39 = arith.addf %38, %37 : vector<8x16x16xf32>
    %40 = arith.divf %38, %39 : vector<8x16x16xf32>
    %41 = vector.shape_cast %40 : vector<8x16x16xf32> to vector<128x16xf32>
    %42 = vector.extract_strided_slice %34 {offsets = [0, 16, 16], sizes = [8, 16, 16], strides = [1, 1, 1]} : vector<8x32x32xf32> to vector<8x16x16xf32>
    %43 = arith.negf %42 : vector<8x16x16xf32>
    %44 = math.exp %43 : vector<8x16x16xf32>
    %cst_21 = arith.constant 1.000000e+00 : f32
    %45 = vector.broadcast %cst_21 : f32 to vector<8x16x16xf32>
    %46 = arith.addf %45, %44 : vector<8x16x16xf32>
    %47 = arith.divf %45, %46 : vector<8x16x16xf32>
    %48 = vector.shape_cast %47 : vector<8x16x16xf32> to vector<128x16xf32>
    %c0_22 = arith.constant 0 : index
    %c0_23 = arith.constant 0 : index
    %49 = vector.load %arg4[%c0_22, %c0_23] : memref<16x256xf32, #tpu.memory_space<vmem>>, vector<16x256xf32>
    %cst_24 = arith.constant dense<0.000000e+00> : vector<128x256xf32>
    %50 = tpu.matmul %41, %49, %cst_24 {dimension_numbers = #tpu.dot_dimension_numbers<[1], [0], [0], [1], [0, 0, 1, 1], [], []>} : vector<128x16xf32>, vector<16x256xf32>, vector<128x256xf32> -> vector<128x256xf32>
    %c0_25 = arith.constant 0 : index
    %c0_26 = arith.constant 0 : index
    %51 = vector.load %arg5[%c0_25, %c0_26] : memref<16x256xf32, #tpu.memory_space<vmem>>, vector<16x256xf32>
    %cst_27 = arith.constant dense<0.000000e+00> : vector<128x256xf32>
    %52 = tpu.matmul %48, %51, %cst_27 {dimension_numbers = #tpu.dot_dimension_numbers<[1], [0], [0], [1], [0, 0, 1, 1], [], []>} : vector<128x16xf32>, vector<16x256xf32>, vector<128x256xf32> -> vector<128x256xf32>
    %53 = arith.mulf %50, %52 : vector<128x256xf32>
    %54 = vector.shape_cast %53 : vector<128x256xf32> to vector<8x16x256xf32>
    %c0_28 = arith.constant 0 : index
    %c0_29 = arith.constant 0 : index
    %c0_30 = arith.constant 0 : index
    %55 = vector.load %arg10[%c0_28, %c0_29, %c0_30] : memref<8x16x256xf32, #tpu.memory_space<vmem>>, vector<8x16x256xf32>
    tpu.vector_store %arg10[%c0_28, %c0_29, %c0_30], %54 {strides = array<i32>} : memref<8x16x256xf32, #tpu.memory_space<vmem>>, vector<8x16x256xf32>,
    return
  }
  func.func @transform_0(%arg0: i32) -> (i32, i32, i32) {
    %c0_i32 = arith.constant 0 : i32
    %c0_i32_0 = arith.constant 0 : i32
    %c0_i32_1 = arith.constant 0 : i32
    return %arg0, %c0_i32, %c0_i32_0 : i32, i32, i32
  }
  func.func @transform_1(%arg0: i32) -> (i32, i32) {
    %c0_i32 = arith.constant 0 : i32
    %c0_i32_0 = arith.constant 0 : i32
    %c0_i32_1 = arith.constant 0 : i32
    return %c0_i32, %c0_i32_0 : i32, i32
  }
  func.func @transform_2(%arg0: i32) -> (i32, i32) {
    %c0_i32 = arith.constant 0 : i32
    %c0_i32_0 = arith.constant 0 : i32
    %c0_i32_1 = arith.constant 0 : i32
    return %c0_i32, %c0_i32_0 : i32, i32
  }
  func.func @transform_3(%arg0: i32) -> (i32, i32) {
    %c0_i32 = arith.constant 0 : i32
    %c0_i32_0 = arith.constant 0 : i32
    %c0_i32_1 = arith.constant 0 : i32
    return %c0_i32, %c0_i32_0 : i32, i32
  }
  func.func @transform_4(%arg0: i32) -> (i32, i32) {
    %c0_i32 = arith.constant 0 : i32
    %c0_i32_0 = arith.constant 0 : i32
    %c0_i32_1 = arith.constant 0 : i32
    return %c0_i32, %c0_i32_0 : i32, i32
  }
  func.func @transform_5(%arg0: i32) -> (i32, i32) {
    %c0_i32 = arith.constant 0 : i32
    %c0_i32_0 = arith.constant 0 : i32
    %c0_i32_1 = arith.constant 0 : i32
    return %c0_i32, %c0_i32_0 : i32, i32
  }
  func.func @transform_6(%arg0: i32) -> (i32, i32) {
    %c0_i32 = arith.constant 0 : i32
    %c0_i32_0 = arith.constant 0 : i32
    %c0_i32_1 = arith.constant 0 : i32
    return %c0_i32, %c0_i32_0 : i32, i32
  }
  func.func @transform_7(%arg0: i32) -> (i32, i32) {
    %c0_i32 = arith.constant 0 : i32
    %c0_i32_0 = arith.constant 0 : i32
    %c0_i32_1 = arith.constant 0 : i32
    return %c0_i32, %c0_i32_0 : i32, i32
  }
  func.func @transform_8(%arg0: i32) -> (i32, i32) {
    %c0_i32 = arith.constant 0 : i32
    %c0_i32_0 = arith.constant 0 : i32
    %c0_i32_1 = arith.constant 0 : i32
    return %c0_i32, %c0_i32_0 : i32, i32
  }
  func.func @transform_9(%arg0: i32) -> (i32, i32, i32) {
    %c0_i32 = arith.constant 0 : i32
    %c0_i32_0 = arith.constant 0 : i32
    %c0_i32_1 = arith.constant 0 : i32
    return %arg0, %c0_i32, %c0_i32_0 : i32, i32, i32
  }
}

</mosaic_0001>

<llo_original>
// kernel: _lambda_.1
$region0: #{_lambda_.1}
  #allocation0 [shape = 'u32[]', space=smem, size = 0x4, offset = 0x4, fixed_abs, tag = 'smem constant byte address 0x4 - core index']
  #allocation1 [shape = 'u32[72,128]{1,0:T(1,128)}', space=vmem, size = 0x9000, scoped, tag = 'internal scratch']
  %s0 = inlined_call_operand.vmem [shape: f32[8,16,256], index: 0, kind: input, shape index: {}]
  %s1 = inlined_call_operand.vmem [shape: f32[256,32], index: 1, kind: input, shape index: {}]
  %s2 = inlined_call_operand.vmem [shape: f32[1,32], index: 2, kind: input, shape index: {}]
  %s3 = inlined_call_operand.vmem [shape: f32[16,256], index: 3, kind: input, shape index: {}]
  %s4 = inlined_call_operand.vmem [shape: f32[16,256], index: 4, kind: input, shape index: {}]
  %s5 = inlined_call_operand.vmem [shape: f32[4,16], index: 5, kind: input, shape index: {}]
  %s6 = inlined_call_operand.vmem [shape: f32[4,1], index: 6, kind: input, shape index: {}]
  %s7 = inlined_call_operand.vmem [shape: f32[32,4], index: 7, kind: input, shape index: {}]
  %s8 = inlined_call_operand.vmem [shape: f32[32,1], index: 8, kind: input, shape index: {}]
  %s9 = inlined_call_operand.vmem [shape: f32[8,16,256], index: 9, kind: output, shape index: {}]
  %s10 = sld [smem:[#allocation0]]
  $region46: #{_lambda_.1} parent=0
    _
  %s12 = ssub.s32 1, %s10
  %s13 = scalar_select 0, %s12, %s10
  // Predicated region
  $region2: #{_lambda_.1} parent=0 // pred_check
    _
  $region3: #{_lambda_.1} parent=0 // pred_check_branch
    %15 = sbr.rel (0) target = $region5
  $region4: #{_lambda_.1} parent=0 // pred_region
    _
  $region5: #{_lambda_.1} parent=0 // pred_fallthru
    _
  // Predicated region
  $region6: #{_lambda_.1} parent=0 // pred_check
    _
  $region7: #{_lambda_.1} parent=0 // pred_check_branch
    %17 = sbr.rel (0) target = $region9
  $region8: #{_lambda_.1} parent=0 // pred_region
    _
  $region9: #{_lambda_.1} parent=0 // pred_fallthru
    _
  // Predicated region
  $region10: #{_lambda_.1} parent=0 // pred_check
    _
  $region11: #{_lambda_.1} parent=0 // pred_check_branch
    %19 = sbr.rel (0) target = $region13
  $region12: #{_lambda_.1} parent=0 // pred_region
    _
  $region13: #{_lambda_.1} parent=0 // pred_fallthru
    _
  // Predicated region
  $region14: #{_lambda_.1} parent=0 // pred_check
    _
  $region15: #{_lambda_.1} parent=0 // pred_check_branch
    %21 = sbr.rel (0) target = $region17
  $region16: #{_lambda_.1} parent=0 // pred_region
    _
  $region17: #{_lambda_.1} parent=0 // pred_fallthru
    _
  // Predicated region
  $region18: #{_lambda_.1} parent=0 // pred_check
    _
  $region19: #{_lambda_.1} parent=0 // pred_check_branch
    %23 = sbr.rel (0) target = $region21
  $region20: #{_lambda_.1} parent=0 // pred_region
    _
  $region21: #{_lambda_.1} parent=0 // pred_fallthru
    _
  // Predicated region
  $region22: #{_lambda_.1} parent=0 // pred_check
    _
  $region23: #{_lambda_.1} parent=0 // pred_check_branch
    %25 = sbr.rel (0) target = $region25
  $region24: #{_lambda_.1} parent=0 // pred_region
    _
  $region25: #{_lambda_.1} parent=0 // pred_fallthru
    _
  // Predicated region
  $region26: #{_lambda_.1} parent=0 // pred_check
    _
  $region27: #{_lambda_.1} parent=0 // pred_check_branch
    %27 = sbr.rel (0) target = $region29
  $region28: #{_lambda_.1} parent=0 // pred_region
    _
  $region29: #{_lambda_.1} parent=0 // pred_fallthru
    _
  // Predicated region
  $region30: #{_lambda_.1} parent=0 // pred_check
    _
  $region31: #{_lambda_.1} parent=0 // pred_check_branch
    %29 = sbr.rel (0) target = $region33
  $region32: #{_lambda_.1} parent=0 // pred_region
    _
  $region33: #{_lambda_.1} parent=0 // pred_fallthru
    _
  // Predicated region
  $region34: #{_lambda_.1} parent=0 // pred_check
    _
  $region35: #{_lambda_.1} parent=0 // pred_check_branch
    %31 = sbr.rel (0) target = $region37
  $region36: #{_lambda_.1} parent=0 // pred_region
    _
  $region37: #{_lambda_.1} parent=0 // pred_fallthru
    _
  %v32 = vld [vmem:[%s0] sm:$0xff]
  %v33 = vld [vmem:[%s0 + $0x8] sm:$0xff]
  %v34 = vld [vmem:[%s0 + $0x10] sm:$0xff]
  %v35 = vld [vmem:[%s0 + $0x18] sm:$0xff]
  %v36 = vld [vmem:[%s0 + $0x20] sm:$0xff]
  %v37 = vld [vmem:[%s0 + $0x28] sm:$0xff]
  %v38 = vld [vmem:[%s0 + $0x30] sm:$0xff]
  %v39 = vld [vmem:[%s0 + $0x38] sm:$0xff]
  %v40 = vld [vmem:[%s0 + $0x40] sm:$0xff]
  %v41 = vld [vmem:[%s0 + $0x48] sm:$0xff]
  %v42 = vld [vmem:[%s0 + $0x50] sm:$0xff]
  %v43 = vld [vmem:[%s0 + $0x58] sm:$0xff]
  %v44 = vld [vmem:[%s0 + $0x60] sm:$0xff]
  %v45 = vld [vmem:[%s0 + $0x68] sm:$0xff]
  %v46 = vld [vmem:[%s0 + $0x70] sm:$0xff]
  %v47 = vld [vmem:[%s0 + $0x78] sm:$0xff]
  %v48 = vld [vmem:[%s0 + $0x80] sm:$0xff]
  %v49 = vld [vmem:[%s0 + $0x88] sm:$0xff]
  %v50 = vld [vmem:[%s0 + $0x90] sm:$0xff]
  %v51 = vld [vmem:[%s0 + $0x98] sm:$0xff]
  %v52 = vld [vmem:[%s0 + $0xa0] sm:$0xff]
  %v53 = vld [vmem:[%s0 + $0xa8] sm:$0xff]
  %v54 = vld [vmem:[%s0 + $0xb0] sm:$0xff]
  %v55 = vld [vmem:[%s0 + $0xb8] sm:$0xff]
  %v56 = vld [vmem:[%s0 + $0xc0] sm:$0xff]
  %v57 = vld [vmem:[%s0 + $0xc8] sm:$0xff]
  %v58 = vld [vmem:[%s0 + $0xd0] sm:$0xff]
  %v59 = vld [vmem:[%s0 + $0xd8] sm:$0xff]
  %v60 = vld [vmem:[%s0 + $0xe0] sm:$0xff]
  %v61 = vld [vmem:[%s0 + $0xe8] sm:$0xff]
  %v62 = vld [vmem:[%s0 + $0xf0] sm:$0xff]
  %v63 = vld [vmem:[%s0 + $0xf8] sm:$0xff]
  %v64 = vld [vmem:[%s1] sm:$0xff]
  %v65 = vld [vmem:[%s1 + $0x8] sm:$0xff]
  %v66 = vld [vmem:[%s1 + $0x10] sm:$0xff]
  %v67 = vld [vmem:[%s1 + $0x18] sm:$0xff]
  %v68 = vld [vmem:[%s1 + $0x20] sm:$0xff]
  %v69 = vld [vmem:[%s1 + $0x28] sm:$0xff]
  %v70 = vld [vmem:[%s1 + $0x30] sm:$0xff]
  %v71 = vld [vmem:[%s1 + $0x38] sm:$0xff]
  %v72 = vld [vmem:[%s1 + $0x40] sm:$0xff]
  %v73 = vld [vmem:[%s1 + $0x48] sm:$0xff]
  %v74 = vld [vmem:[%s1 + $0x50] sm:$0xff]
  %v75 = vld [vmem:[%s1 + $0x58] sm:$0xff]
  %v76 = vld [vmem:[%s1 + $0x60] sm:$0xff]
  %v77 = vld [vmem:[%s1 + $0x68] sm:$0xff]
  %v78 = vld [vmem:[%s1 + $0x70] sm:$0xff]
  %v79 = vld [vmem:[%s1 + $0x78] sm:$0xff]
  %v80 = vld [vmem:[%s1 + $0x80] sm:$0xff]
  %v81 = vld [vmem:[%s1 + $0x88] sm:$0xff]
  %v82 = vld [vmem:[%s1 + $0x90] sm:$0xff]
  %v83 = vld [vmem:[%s1 + $0x98] sm:$0xff]
  %v84 = vld [vmem:[%s1 + $0xa0] sm:$0xff]
  %v85 = vld [vmem:[%s1 + $0xa8] sm:$0xff]
  %v86 = vld [vmem:[%s1 + $0xb0] sm:$0xff]
  %v87 = vld [vmem:[%s1 + $0xb8] sm:$0xff]
  %v88 = vld [vmem:[%s1 + $0xc0] sm:$0xff]
  %v89 = vld [vmem:[%s1 + $0xc8] sm:$0xff]
  %v90 = vld [vmem:[%s1 + $0xd0] sm:$0xff]
  %v91 = vld [vmem:[%s1 + $0xd8] sm:$0xff]
  %v92 = vld [vmem:[%s1 + $0xe0] sm:$0xff]
  %v93 = vld [vmem:[%s1 + $0xe8] sm:$0xff]
  %v94 = vld [vmem:[%s1 + $0xf0] sm:$0xff]
  %v95 = vld [vmem:[%s1 + $0xf8] sm:$0xff]
  %96 = vmatpush.msra.mxu0 %v79
  %97 = vmatpush.msra.mxu0 %v78
  %98 = vmatpush.msra.mxu0 %v77
  %99 = vmatpush.msra.mxu0 %v76
  %100 = vmatpush.msra.mxu0 %v75
  %101 = vmatpush.msra.mxu0 %v74
  %102 = vmatpush.msra.mxu0 %v73
  %103 = vmatpush.msra.mxu0 %v72
  %104 = vmatpush.msra.mxu0 %v71
  %105 = vmatpush.msra.mxu0 %v70
  %106 = vmatpush.msra.mxu0 %v69
  %107 = vmatpush.msra.mxu0 %v68
  %108 = vmatpush.msra.mxu0 %v67
  %109 = vmatpush.msra.mxu0 %v66
  %110 = vmatpush.msra.mxu0 %v65
  %111 = vmatpush.msra.mxu0 %v64
  %112 = vmatmul.f32.gmra.mxu0 %v32
  %v113 = vpop.f32.mrf.mxu0
  %v114 = vadd.f32 0.0, %v113
  %115 = vmatmul.f32.gmra.mxu0 %v34
  %v116 = vpop.f32.mrf.mxu0
  %v117 = vadd.f32 0.0, %v116
  %118 = vmatmul.f32.gmra.mxu0 %v36
  %v119 = vpop.f32.mrf.mxu0
  %v120 = vadd.f32 0.0, %v119
  %121 = vmatmul.f32.gmra.mxu0 %v38
  %v122 = vpop.f32.mrf.mxu0
  %v123 = vadd.f32 0.0, %v122
  %124 = vmatmul.f32.gmra.mxu0 %v40
  %v125 = vpop.f32.mrf.mxu0
  %v126 = vadd.f32 0.0, %v125
  %127 = vmatmul.f32.gmra.mxu0 %v42
  %v128 = vpop.f32.mrf.mxu0
  %v129 = vadd.f32 0.0, %v128
  %130 = vmatmul.f32.gmra.mxu0 %v44
  %v131 = vpop.f32.mrf.mxu0
  %v132 = vadd.f32 0.0, %v131
  %133 = vmatmul.f32.gmra.mxu0 %v46
  %v134 = vpop.f32.mrf.mxu0
  %v135 = vadd.f32 0.0, %v134
  %136 = vmatmul.f32.gmra.mxu0 %v48
  %v137 = vpop.f32.mrf.mxu0
  %v138 = vadd.f32 0.0, %v137
  %139 = vmatmul.f32.gmra.mxu0 %v50
  %v140 = vpop.f32.mrf.mxu0
  %v141 = vadd.f32 0.0, %v140
  %142 = vmatmul.f32.gmra.mxu0 %v52
  %v143 = vpop.f32.mrf.mxu0
  %v144 = vadd.f32 0.0, %v143
  %145 = vmatmul.f32.gmra.mxu0 %v54
  %v146 = vpop.f32.mrf.mxu0
  %v147 = vadd.f32 0.0, %v146
  %148 = vmatmul.f32.gmra.mxu0 %v56
  %v149 = vpop.f32.mrf.mxu0
  %v150 = vadd.f32 0.0, %v149
  %151 = vmatmul.f32.gmra.mxu0 %v58
  %v152 = vpop.f32.mrf.mxu0
  %v153 = vadd.f32 0.0, %v152
  %154 = vmatmul.f32.gmra.mxu0 %v60
  %v155 = vpop.f32.mrf.mxu0
  %v156 = vadd.f32 0.0, %v155
  %157 = vmatmul.f32.gmra.mxu0 %v62
  %v158 = vpop.f32.mrf.mxu0
  %v159 = vadd.f32 0.0, %v158
  %160 = vdwg.mxu0
  %161 = vmatpush.msra.mxu0 %v95
  %162 = vmatpush.msra.mxu0 %v94
  %163 = vmatpush.msra.mxu0 %v93
  %164 = vmatpush.msra.mxu0 %v92
  %165 = vmatpush.msra.mxu0 %v91
  %166 = vmatpush.msra.mxu0 %v90
  %167 = vmatpush.msra.mxu0 %v89
  %168 = vmatpush.msra.mxu0 %v88
  %169 = vmatpush.msra.mxu0 %v87
  %170 = vmatpush.msra.mxu0 %v86
  %171 = vmatpush.msra.mxu0 %v85
  %172 = vmatpush.msra.mxu0 %v84
  %173 = vmatpush.msra.mxu0 %v83
  %174 = vmatpush.msra.mxu0 %v82
  %175 = vmatpush.msra.mxu0 %v81
  %176 = vmatpush.msra.mxu0 %v80
  %177 = vmatmul.f32.gmra.mxu0 %v33
  %v178 = vpop.f32.mrf.mxu0
  %v179 = vadd.f32 %v114, %v178
  %180 = vmatmul.f32.gmra.mxu0 %v35
  %v181 = vpop.f32.mrf.mxu0
  %v182 = vadd.f32 %v117, %v181
  %183 = vmatmul.f32.gmra.mxu0 %v37
  %v184 = vpop.f32.mrf.mxu0
  %v185 = vadd.f32 %v120, %v184
  %186 = vmatmul.f32.gmra.mxu0 %v39
  %v187 = vpop.f32.mrf.mxu0
  %v188 = vadd.f32 %v123, %v187
  %189 = vmatmul.f32.gmra.mxu0 %v41
  %v190 = vpop.f32.mrf.mxu0
  %v191 = vadd.f32 %v126, %v190
  %192 = vmatmul.f32.gmra.mxu0 %v43
  %v193 = vpop.f32.mrf.mxu0
  %v194 = vadd.f32 %v129, %v193
  %195 = vmatmul.f32.gmra.mxu0 %v45
  %v196 = vpop.f32.mrf.mxu0
  %v197 = vadd.f32 %v132, %v196
  %198 = vmatmul.f32.gmra.mxu0 %v47
  %v199 = vpop.f32.mrf.mxu0
  %v200 = vadd.f32 %v135, %v199
  %201 = vmatmul.f32.gmra.mxu0 %v49
  %v202 = vpop.f32.mrf.mxu0
  %v203 = vadd.f32 %v138, %v202
  %204 = vmatmul.f32.gmra.mxu0 %v51
  %v205 = vpop.f32.mrf.mxu0
  %v206 = vadd.f32 %v141, %v205
  %207 = vmatmul.f32.gmra.mxu0 %v53
  %v208 = vpop.f32.mrf.mxu0
  %v209 = vadd.f32 %v144, %v208
  %210 = vmatmul.f32.gmra.mxu0 %v55
  %v211 = vpop.f32.mrf.mxu0
  %v212 = vadd.f32 %v147, %v211
  %213 = vmatmul.f32.gmra.mxu0 %v57
  %v214 = vpop.f32.mrf.mxu0
  %v215 = vadd.f32 %v150, %v214
  %216 = vmatmul.f32.gmra.mxu0 %v59
  %v217 = vpop.f32.mrf.mxu0
  %v218 = vadd.f32 %v153, %v217
  %219 = vmatmul.f32.gmra.mxu0 %v61
  %v220 = vpop.f32.mrf.mxu0
  %v221 = vadd.f32 %v156, %v220
  %222 = vmatmul.f32.gmra.mxu0 %v63
  %v223 = vpop.f32.mrf.mxu0
  %v224 = vadd.f32 %v159, %v223
  %225 = vdwg.mxu0
  %v226 = vld [vmem:[%s2] sm:$0x1]
  %v228 = vperm.slane %v226, 0
  %v230 = vmul.f32 %v179, %v228
  %v231 = vmul.f32 %v182, %v228
  %v232 = vmul.f32 %v185, %v228
  %v233 = vmul.f32 %v188, %v228
  %v234 = vmul.f32 %v191, %v228
  %v235 = vmul.f32 %v194, %v228
  %v236 = vmul.f32 %v197, %v228
  %v237 = vmul.f32 %v200, %v228
  %v238 = vmul.f32 %v203, %v228
  %v239 = vmul.f32 %v206, %v228
  %v240 = vmul.f32 %v209, %v228
  %v241 = vmul.f32 %v212, %v228
  %v242 = vmul.f32 %v215, %v228
  %v243 = vmul.f32 %v218, %v228
  %v244 = vmul.f32 %v221, %v228
  %v245 = vmul.f32 %v224, %v228
  %v246 = vld [vmem:[%s5] sm:$0xf]
  %v247 = vld [vmem:[%s6] sm:$0xf]
  %249 = vset.pattern.permute.xlu0 0
  %250 = vperm.xlu0 %249, %v247
  %v251 = vpop.permute.xlu0 %250
  %vm253 = vcmask 130048
  %v255 = vsel %vm253, %v246, 0
  %257 = vmatpush.msra.mxu0 0.0
  %258 = vmatpush.msra.mxu0 0.0
  %259 = vmatpush.msra.mxu0 0.0
  %260 = vmatpush.msra.mxu0 0.0
  %261 = vmatpush.msra.mxu0 0.0
  %262 = vmatpush.msra.mxu0 0.0
  %263 = vmatpush.msra.mxu0 0.0
  %264 = vmatpush.msra.mxu0 0.0
  %265 = vmatpush.msra.mxu0 0.0
  %266 = vmatpush.msra.mxu0 0.0
  %267 = vmatpush.msra.mxu0 0.0
  %268 = vmatpush.msra.mxu0 0.0
  %269 = vmatpush.msra.mxu0 0.0
  %270 = vmatpush.msra.mxu0 0.0
  %271 = vmatpush.msra.mxu0 %v231
  %272 = vmatpush.msra.mxu0 %v230
  %273 = vmatmul.f32.gmra.mxu0 %v255
  %v274 = vpop.f32.mrf.mxu0
  %v275 = vadd.f32 %v251, %v274
  %276 = vdwg.mxu0
  %277 = vmatpush.msra.mxu0 0.0
  %278 = vmatpush.msra.mxu0 0.0
  %279 = vmatpush.msra.mxu0 0.0
  %280 = vmatpush.msra.mxu0 0.0
  %281 = vmatpush.msra.mxu0 0.0
  %282 = vmatpush.msra.mxu0 0.0
  %283 = vmatpush.msra.mxu0 0.0
  %284 = vmatpush.msra.mxu0 0.0
  %285 = vmatpush.msra.mxu0 0.0
  %286 = vmatpush.msra.mxu0 0.0
  %287 = vmatpush.msra.mxu0 0.0
  %288 = vmatpush.msra.mxu0 0.0
  %289 = vmatpush.msra.mxu0 0.0
  %290 = vmatpush.msra.mxu0 0.0
  %291 = vmatpush.msra.mxu0 %v233
  %292 = vmatpush.msra.mxu0 %v232
  %293 = vmatmul.f32.gmra.mxu0 %v255
  %v294 = vpop.f32.mrf.mxu0
  %v295 = vadd.f32 %v251, %v294
  %296 = vdwg.mxu0
  %297 = vmatpush.msra.mxu0 0.0
  %298 = vmatpush.msra.mxu0 0.0
  %299 = vmatpush.msra.mxu0 0.0
  %300 = vmatpush.msra.mxu0 0.0
  %301 = vmatpush.msra.mxu0 0.0
  %302 = vmatpush.msra.mxu0 0.0
  %303 = vmatpush.msra.mxu0 0.0
  %304 = vmatpush.msra.mxu0 0.0
  %305 = vmatpush.msra.mxu0 0.0
  %306 = vmatpush.msra.mxu0 0.0
  %307 = vmatpush.msra.mxu0 0.0
  %308 = vmatpush.msra.mxu0 0.0
  %309 = vmatpush.msra.mxu0 0.0
  %310 = vmatpush.msra.mxu0 0.0
  %311 = vmatpush.msra.mxu0 %v235
  %312 = vmatpush.msra.mxu0 %v234
  %313 = vmatmul.f32.gmra.mxu0 %v255
  %v314 = vpop.f32.mrf.mxu0
  %v315 = vadd.f32 %v251, %v314
  %316 = vdwg.mxu0
  %317 = vmatpush.msra.mxu0 0.0
  %318 = vmatpush.msra.mxu0 0.0
  %319 = vmatpush.msra.mxu0 0.0
  %320 = vmatpush.msra.mxu0 0.0
  %321 = vmatpush.msra.mxu0 0.0
  %322 = vmatpush.msra.mxu0 0.0
  %323 = vmatpush.msra.mxu0 0.0
  %324 = vmatpush.msra.mxu0 0.0
  %325 = vmatpush.msra.mxu0 0.0
  %326 = vmatpush.msra.mxu0 0.0
  %327 = vmatpush.msra.mxu0 0.0
  %328 = vmatpush.msra.mxu0 0.0
  %329 = vmatpush.msra.mxu0 0.0
  %330 = vmatpush.msra.mxu0 0.0
  %331 = vmatpush.msra.mxu0 %v237
  %332 = vmatpush.msra.mxu0 %v236
  %333 = vmatmul.f32.gmra.mxu0 %v255
  %v334 = vpop.f32.mrf.mxu0
  %v335 = vadd.f32 %v251, %v334
  %336 = vdwg.mxu0
  %337 = vmatpush.msra.mxu0 0.0
  %338 = vmatpush.msra.mxu0 0.0
  %339 = vmatpush.msra.mxu0 0.0
  %340 = vmatpush.msra.mxu0 0.0
  %341 = vmatpush.msra.mxu0 0.0
  %342 = vmatpush.msra.mxu0 0.0
  %343 = vmatpush.msra.mxu0 0.0
  %344 = vmatpush.msra.mxu0 0.0
  %345 = vmatpush.msra.mxu0 0.0
  %346 = vmatpush.msra.mxu0 0.0
  %347 = vmatpush.msra.mxu0 0.0
  %348 = vmatpush.msra.mxu0 0.0
  %349 = vmatpush.msra.mxu0 0.0
  %350 = vmatpush.msra.mxu0 0.0
  %351 = vmatpush.msra.mxu0 %v239
  %352 = vmatpush.msra.mxu0 %v238
  %353 = vmatmul.f32.gmra.mxu0 %v255
  %v354 = vpop.f32.mrf.mxu0
  %v355 = vadd.f32 %v251, %v354
  %356 = vdwg.mxu0
  %357 = vmatpush.msra.mxu0 0.0
  %358 = vmatpush.msra.mxu0 0.0
  %359 = vmatpush.msra.mxu0 0.0
  %360 = vmatpush.msra.mxu0 0.0
  %361 = vmatpush.msra.mxu0 0.0
  %362 = vmatpush.msra.mxu0 0.0
  %363 = vmatpush.msra.mxu0 0.0
  %364 = vmatpush.msra.mxu0 0.0
  %365 = vmatpush.msra.mxu0 0.0
  %366 = vmatpush.msra.mxu0 0.0
  %367 = vmatpush.msra.mxu0 0.0
  %368 = vmatpush.msra.mxu0 0.0
  %369 = vmatpush.msra.mxu0 0.0
  %370 = vmatpush.msra.mxu0 0.0
  %371 = vmatpush.msra.mxu0 %v241
  %372 = vmatpush.msra.mxu0 %v240
  %373 = vmatmul.f32.gmra.mxu0 %v255
  %v374 = vpop.f32.mrf.mxu0
  %v375 = vadd.f32 %v251, %v374
  %376 = vdwg.mxu0
  %377 = vmatpush.msra.mxu0 0.0
  %378 = vmatpush.msra.mxu0 0.0
  %379 = vmatpush.msra.mxu0 0.0
  %380 = vmatpush.msra.mxu0 0.0
  %381 = vmatpush.msra.mxu0 0.0
  %382 = vmatpush.msra.mxu0 0.0
  %383 = vmatpush.msra.mxu0 0.0
  %384 = vmatpush.msra.mxu0 0.0
  %385 = vmatpush.msra.mxu0 0.0
  %386 = vmatpush.msra.mxu0 0.0
  %387 = vmatpush.msra.mxu0 0.0
  %388 = vmatpush.msra.mxu0 0.0
  %389 = vmatpush.msra.mxu0 0.0
  %390 = vmatpush.msra.mxu0 0.0
  %391 = vmatpush.msra.mxu0 %v243
  %392 = vmatpush.msra.mxu0 %v242
  %393 = vmatmul.f32.gmra.mxu0 %v255
  %v394 = vpop.f32.mrf.mxu0
  %v395 = vadd.f32 %v251, %v394
  %396 = vdwg.mxu0
  %397 = vmatpush.msra.mxu0 0.0
  %398 = vmatpush.msra.mxu0 0.0
  %399 = vmatpush.msra.mxu0 0.0
  %400 = vmatpush.msra.mxu0 0.0
  %401 = vmatpush.msra.mxu0 0.0
  %402 = vmatpush.msra.mxu0 0.0
  %403 = vmatpush.msra.mxu0 0.0
  %404 = vmatpush.msra.mxu0 0.0
  %405 = vmatpush.msra.mxu0 0.0
  %406 = vmatpush.msra.mxu0 0.0
  %407 = vmatpush.msra.mxu0 0.0
  %408 = vmatpush.msra.mxu0 0.0
  %409 = vmatpush.msra.mxu0 0.0
  %410 = vmatpush.msra.mxu0 0.0
  %411 = vmatpush.msra.mxu0 %v245
  %412 = vmatpush.msra.mxu0 %v244
  %413 = vmatmul.f32.gmra.mxu0 %v255
  %v414 = vpop.f32.mrf.mxu0
  %v415 = vadd.f32 %v251, %v414
  %416 = vdwg.mxu0
  %v417 = vadd.f32 %v275, 3.0
  %v418 = vadd.f32 %v295, 3.0
  %v419 = vadd.f32 %v315, 3.0
  %v420 = vadd.f32 %v335, 3.0
  %v421 = vadd.f32 %v355, 3.0
  %v422 = vadd.f32 %v375, 3.0
  %v423 = vadd.f32 %v395, 3.0
  %v424 = vadd.f32 %v415, 3.0
  %v425 = vmax.f32 %v417, 0.0
  %v426 = vmax.f32 %v418, 0.0
  %v427 = vmax.f32 %v419, 0.0
  %v428 = vmax.f32 %v420, 0.0
  %v429 = vmax.f32 %v421, 0.0
  %v430 = vmax.f32 %v422, 0.0
  %v431 = vmax.f32 %v423, 0.0
  %v432 = vmax.f32 %v424, 0.0
  %v433 = vmin.f32 %v425, 6.0
  %v434 = vmin.f32 %v426, 6.0
  %v435 = vmin.f32 %v427, 6.0
  %v436 = vmin.f32 %v428, 6.0
  %v437 = vmin.f32 %v429, 6.0
  %v438 = vmin.f32 %v430, 6.0
  %v439 = vmin.f32 %v431, 6.0
  %v440 = vmin.f32 %v432, 6.0
  %v441 = vmul.f32 %v275, %v433
  %v442 = vmul.f32 %v295, %v434
  %v443 = vmul.f32 %v315, %v435
  %v444 = vmul.f32 %v335, %v436
  %v445 = vmul.f32 %v355, %v437
  %v446 = vmul.f32 %v375, %v438
  %v447 = vmul.f32 %v395, %v439
  %v448 = vmul.f32 %v415, %v440
  %v449 = vmul.f32 %v441, 0.16666667
  %v450 = vmul.f32 %v442, 0.16666667
  %v451 = vmul.f32 %v443, 0.16666667
  %v452 = vmul.f32 %v444, 0.16666667
  %v453 = vmul.f32 %v445, 0.16666667
  %v454 = vmul.f32 %v446, 0.16666667
  %v455 = vmul.f32 %v447, 0.16666667
  %v456 = vmul.f32 %v448, 0.16666667
  %v457 = vld [vmem:[%s7] sm:$0xff]
  %v458 = vld [vmem:[%s7 + $0x8] sm:$0xff]
  %v459 = vld [vmem:[%s7 + $0x10] sm:$0xff]
  %v460 = vld [vmem:[%s7 + $0x18] sm:$0xff]
  %v461 = vld [vmem:[%s8] sm:$0xff]
  %v462 = vld [vmem:[%s8 + $0x8] sm:$0xff]
  %v463 = vld [vmem:[%s8 + $0x10] sm:$0xff]
  %v464 = vld [vmem:[%s8 + $0x18] sm:$0xff]
  %466 = vset.pattern.permute.xlu0 0
  %467 = vperm.xlu0 %466, %v461
  %v468 = vpop.permute.xlu0 %467
  %471 = vset.pattern.permute.xlu0 0
  %472 = vperm.xlu0 %471, %v462
  %v473 = vpop.permute.xlu0 %472
  %476 = vset.pattern.permute.xlu0 0
  %477 = vperm.xlu0 %476, %v463
  %v478 = vpop.permute.xlu0 %477
  %481 = vset.pattern.permute.xlu0 0
  %482 = vperm.xlu0 %481, %v464
  %v483 = vpop.permute.xlu0 %482
  %vm485 = vcmask 31744
  %v487 = vsel %vm485, %v457, 0
  %v490 = vsel %vm485, %v458, 0
  %v493 = vsel %vm485, %v459, 0
  %v496 = vsel %vm485, %v460, 0
  %vm498 = vcmask 1043456
  %v500 = vsel %vm498, %v449, 0
  %502 = vmatpush.msra.mxu0 0.0
  %503 = vmatpush.msra.mxu0 0.0
  %504 = vmatpush.msra.mxu0 0.0
  %505 = vmatpush.msra.mxu0 0.0
  %506 = vmatpush.msra.mxu0 0.0
  %507 = vmatpush.msra.mxu0 0.0
  %508 = vmatpush.msra.mxu0 0.0
  %509 = vmatpush.msra.mxu0 0.0
  %510 = vmatpush.msra.mxu0 0.0
  %511 = vmatpush.msra.mxu0 0.0
  %512 = vmatpush.msra.mxu0 0.0
  %513 = vmatpush.msra.mxu0 0.0
  %514 = vmatpush.msra.mxu0 0.0
  %515 = vmatpush.msra.mxu0 0.0
  %516 = vmatpush.msra.mxu0 0.0
  %517 = vmatpush.msra.mxu0 %v500
  %518 = vmatmul.f32.gmra.mxu0 %v487
  %v519 = vpop.f32.mrf.mxu0
  %v520 = vadd.f32 %v468, %v519
  %521 = vmatmul.f32.gmra.mxu0 %v490
  %v522 = vpop.f32.mrf.mxu0
  %v523 = vadd.f32 %v473, %v522
  %524 = vmatmul.f32.gmra.mxu0 %v493
  %v525 = vpop.f32.mrf.mxu0
  %v526 = vadd.f32 %v478, %v525
  %527 = vmatmul.f32.gmra.mxu0 %v496
  %v528 = vpop.f32.mrf.mxu0
  %v529 = vadd.f32 %v483, %v528
  %530 = vdwg.mxu0
  %v532 = vsel %vm498, %v450, 0
  %534 = vmatpush.msra.mxu0 0.0
  %535 = vmatpush.msra.mxu0 0.0
  %536 = vmatpush.msra.mxu0 0.0
  %537 = vmatpush.msra.mxu0 0.0
  %538 = vmatpush.msra.mxu0 0.0
  %539 = vmatpush.msra.mxu0 0.0
  %540 = vmatpush.msra.mxu0 0.0
  %541 = vmatpush.msra.mxu0 0.0
  %542 = vmatpush.msra.mxu0 0.0
  %543 = vmatpush.msra.mxu0 0.0
  %544 = vmatpush.msra.mxu0 0.0
  %545 = vmatpush.msra.mxu0 0.0
  %546 = vmatpush.msra.mxu0 0.0
  %547 = vmatpush.msra.mxu0 0.0
  %548 = vmatpush.msra.mxu0 0.0
  %549 = vmatpush.msra.mxu0 %v532
  %550 = vmatmul.f32.gmra.mxu0 %v487
  %v551 = vpop.f32.mrf.mxu0
  %v552 = vadd.f32 %v468, %v551
  %553 = vmatmul.f32.gmra.mxu0 %v490
  %v554 = vpop.f32.mrf.mxu0
  %v555 = vadd.f32 %v473, %v554
  %556 = vmatmul.f32.gmra.mxu0 %v493
  %v557 = vpop.f32.mrf.mxu0
  %v558 = vadd.f32 %v478, %v557
  %559 = vmatmul.f32.gmra.mxu0 %v496
  %v560 = vpop.f32.mrf.mxu0
  %v561 = vadd.f32 %v483, %v560
  %562 = vdwg.mxu0
  %v564 = vsel %vm498, %v451, 0
  %566 = vmatpush.msra.mxu0 0.0
  %567 = vmatpush.msra.mxu0 0.0
  %568 = vmatpush.msra.mxu0 0.0
  %569 = vmatpush.msra.mxu0 0.0
  %570 = vmatpush.msra.mxu0 0.0
  %571 = vmatpush.msra.mxu0 0.0
  %572 = vmatpush.msra.mxu0 0.0
  %573 = vmatpush.msra.mxu0 0.0
  %574 = vmatpush.msra.mxu0 0.0
  %575 = vmatpush.msra.mxu0 0.0
  %576 = vmatpush.msra.mxu0 0.0
  %577 = vmatpush.msra.mxu0 0.0
  %578 = vmatpush.msra.mxu0 0.0
  %579 = vmatpush.msra.mxu0 0.0
  %580 = vmatpush.msra.mxu0 0.0
  %581 = vmatpush.msra.mxu0 %v564
  %582 = vmatmul.f32.gmra.mxu0 %v487
  %v583 = vpop.f32.mrf.mxu0
  %v584 = vadd.f32 %v468, %v583
  %585 = vmatmul.f32.gmra.mxu0 %v490
  %v586 = vpop.f32.mrf.mxu0
  %v587 = vadd.f32 %v473, %v586
  %588 = vmatmul.f32.gmra.mxu0 %v493
  %v589 = vpop.f32.mrf.mxu0
  %v590 = vadd.f32 %v478, %v589
  %591 = vmatmul.f32.gmra.mxu0 %v496
  %v592 = vpop.f32.mrf.mxu0
  %v593 = vadd.f32 %v483, %v592
  %594 = vdwg.mxu0
  %v596 = vsel %vm498, %v452, 0
  %598 = vmatpush.msra.mxu0 0.0
  %599 = vmatpush.msra.mxu0 0.0
  %600 = vmatpush.msra.mxu0 0.0
  %601 = vmatpush.msra.mxu0 0.0
  %602 = vmatpush.msra.mxu0 0.0
  %603 = vmatpush.msra.mxu0 0.0
  %604 = vmatpush.msra.mxu0 0.0
  %605 = vmatpush.msra.mxu0 0.0
  %606 = vmatpush.msra.mxu0 0.0
  %607 = vmatpush.msra.mxu0 0.0
  %608 = vmatpush.msra.mxu0 0.0
  %609 = vmatpush.msra.mxu0 0.0
  %610 = vmatpush.msra.mxu0 0.0
  %611 = vmatpush.msra.mxu0 0.0
  %612 = vmatpush.msra.mxu0 0.0
  %613 = vmatpush.msra.mxu0 %v596
  %614 = vmatmul.f32.gmra.mxu0 %v487
  %v615 = vpop.f32.mrf.mxu0
  %v616 = vadd.f32 %v468, %v615
  %617 = vmatmul.f32.gmra.mxu0 %v490
  %v618 = vpop.f32.mrf.mxu0
  %v619 = vadd.f32 %v473, %v618
  %620 = vmatmul.f32.gmra.mxu0 %v493
  %v621 = vpop.f32.mrf.mxu0
  %v622 = vadd.f32 %v478, %v621
  %623 = vmatmul.f32.gmra.mxu0 %v496
  %v624 = vpop.f32.mrf.mxu0
  %v625 = vadd.f32 %v483, %v624
  %626 = vdwg.mxu0
  %v628 = vsel %vm498, %v453, 0
  %630 = vmatpush.msra.mxu0 0.0
  %631 = vmatpush.msra.mxu0 0.0
  %632 = vmatpush.msra.mxu0 0.0
  %633 = vmatpush.msra.mxu0 0.0
  %634 = vmatpush.msra.mxu0 0.0
  %635 = vmatpush.msra.mxu0 0.0
  %636 = vmatpush.msra.mxu0 0.0
  %637 = vmatpush.msra.mxu0 0.0
  %638 = vmatpush.msra.mxu0 0.0
  %639 = vmatpush.msra.mxu0 0.0
  %640 = vmatpush.msra.mxu0 0.0
  %641 = vmatpush.msra.mxu0 0.0
  %642 = vmatpush.msra.mxu0 0.0
  %643 = vmatpush.msra.mxu0 0.0
  %644 = vmatpush.msra.mxu0 0.0
  %645 = vmatpush.msra.mxu0 %v628
  %646 = vmatmul.f32.gmra.mxu0 %v487
  %v647 = vpop.f32.mrf.mxu0
  %v648 = vadd.f32 %v468, %v647
  %649 = vmatmul.f32.gmra.mxu0 %v490
  %v650 = vpop.f32.mrf.mxu0
  %v651 = vadd.f32 %v473, %v650
  %652 = vmatmul.f32.gmra.mxu0 %v493
  %v653 = vpop.f32.mrf.mxu0
  %v654 = vadd.f32 %v478, %v653
  %655 = vmatmul.f32.gmra.mxu0 %v496
  %v656 = vpop.f32.mrf.mxu0
  %v657 = vadd.f32 %v483, %v656
  %658 = vdwg.mxu0
  %v660 = vsel %vm498, %v454, 0
  %662 = vmatpush.msra.mxu0 0.0
  %663 = vmatpush.msra.mxu0 0.0
  %664 = vmatpush.msra.mxu0 0.0
  %665 = vmatpush.msra.mxu0 0.0
  %666 = vmatpush.msra.mxu0 0.0
  %667 = vmatpush.msra.mxu0 0.0
  %668 = vmatpush.msra.mxu0 0.0
  %669 = vmatpush.msra.mxu0 0.0
  %670 = vmatpush.msra.mxu0 0.0
  %671 = vmatpush.msra.mxu0 0.0
  %672 = vmatpush.msra.mxu0 0.0
  %673 = vmatpush.msra.mxu0 0.0
  %674 = vmatpush.msra.mxu0 0.0
  %675 = vmatpush.msra.mxu0 0.0
  %676 = vmatpush.msra.mxu0 0.0
  %677 = vmatpush.msra.mxu0 %v660
  %678 = vmatmul.f32.gmra.mxu0 %v487
  %v679 = vpop.f32.mrf.mxu0
  %v680 = vadd.f32 %v468, %v679
  %681 = vmatmul.f32.gmra.mxu0 %v490
  %v682 = vpop.f32.mrf.mxu0
  %v683 = vadd.f32 %v473, %v682
  %684 = vmatmul.f32.gmra.mxu0 %v493
  %v685 = vpop.f32.mrf.mxu0
  %v686 = vadd.f32 %v478, %v685
  %687 = vmatmul.f32.gmra.mxu0 %v496
  %v688 = vpop.f32.mrf.mxu0
  %v689 = vadd.f32 %v483, %v688
  %690 = vdwg.mxu0
  %v692 = vsel %vm498, %v455, 0
  %694 = vmatpush.msra.mxu0 0.0
  %695 = vmatpush.msra.mxu0 0.0
  %696 = vmatpush.msra.mxu0 0.0
  %697 = vmatpush.msra.mxu0 0.0
  %698 = vmatpush.msra.mxu0 0.0
  %699 = vmatpush.msra.mxu0 0.0
  %700 = vmatpush.msra.mxu0 0.0
  %701 = vmatpush.msra.mxu0 0.0
  %702 = vmatpush.msra.mxu0 0.0
  %703 = vmatpush.msra.mxu0 0.0
  %704 = vmatpush.msra.mxu0 0.0
  %705 = vmatpush.msra.mxu0 0.0
  %706 = vmatpush.msra.mxu0 0.0
  %707 = vmatpush.msra.mxu0 0.0
  %708 = vmatpush.msra.mxu0 0.0
  %709 = vmatpush.msra.mxu0 %v692
  %710 = vmatmul.f32.gmra.mxu0 %v487
  %v711 = vpop.f32.mrf.mxu0
  %v712 = vadd.f32 %v468, %v711
  %713 = vmatmul.f32.gmra.mxu0 %v490
  %v714 = vpop.f32.mrf.mxu0
  %v715 = vadd.f32 %v473, %v714
  %716 = vmatmul.f32.gmra.mxu0 %v493
  %v717 = vpop.f32.mrf.mxu0
  %v718 = vadd.f32 %v478, %v717
  %719 = vmatmul.f32.gmra.mxu0 %v496
  %v720 = vpop.f32.mrf.mxu0
  %v721 = vadd.f32 %v483, %v720
  %722 = vdwg.mxu0
  %v724 = vsel %vm498, %v456, 0
  %726 = vmatpush.msra.mxu0 0.0
  %727 = vmatpush.msra.mxu0 0.0
  %728 = vmatpush.msra.mxu0 0.0
  %729 = vmatpush.msra.mxu0 0.0
  %730 = vmatpush.msra.mxu0 0.0
  %731 = vmatpush.msra.mxu0 0.0
  %732 = vmatpush.msra.mxu0 0.0
  %733 = vmatpush.msra.mxu0 0.0
  %734 = vmatpush.msra.mxu0 0.0
  %735 = vmatpush.msra.mxu0 0.0
  %736 = vmatpush.msra.mxu0 0.0
  %737 = vmatpush.msra.mxu0 0.0
  %738 = vmatpush.msra.mxu0 0.0
  %739 = vmatpush.msra.mxu0 0.0
  %740 = vmatpush.msra.mxu0 0.0
  %741 = vmatpush.msra.mxu0 %v724
  %742 = vmatmul.f32.gmra.mxu0 %v487
  %v743 = vpop.f32.mrf.mxu0
  %v744 = vadd.f32 %v468, %v743
  %745 = vmatmul.f32.gmra.mxu0 %v490
  %v746 = vpop.f32.mrf.mxu0
  %v747 = vadd.f32 %v473, %v746
  %748 = vmatmul.f32.gmra.mxu0 %v493
  %v749 = vpop.f32.mrf.mxu0
  %v750 = vadd.f32 %v478, %v749
  %751 = vmatmul.f32.gmra.mxu0 %v496
  %v752 = vpop.f32.mrf.mxu0
  %v753 = vadd.f32 %v483, %v752
  %754 = vdwg.mxu0
  %v755 = vxor.u32 %v520, 2147483648
  %v756 = vxor.u32 %v523, 2147483648
  %v757 = vxor.u32 %v552, 2147483648
  %v758 = vxor.u32 %v555, 2147483648
  %v759 = vxor.u32 %v584, 2147483648
  %v760 = vxor.u32 %v587, 2147483648
  %v761 = vxor.u32 %v616, 2147483648
  %v762 = vxor.u32 %v619, 2147483648
  %v763 = vxor.u32 %v648, 2147483648
  %v764 = vxor.u32 %v651, 2147483648
  %v765 = vxor.u32 %v680, 2147483648
  %v766 = vxor.u32 %v683, 2147483648
  %v767 = vxor.u32 %v712, 2147483648
  %v768 = vxor.u32 %v715, 2147483648
  %v769 = vxor.u32 %v744, 2147483648
  %v770 = vxor.u32 %v747, 2147483648
  %v771 = vmul.f32 %v755, 1.442695
  %v772 = vpow.pop %v771
  %v773 = vmul.f32 %v756, 1.442695
  %v774 = vpow.pop %v773
  %v775 = vmul.f32 %v757, 1.442695
  %v776 = vpow.pop %v775
  %v777 = vmul.f32 %v758, 1.442695
  %v778 = vpow.pop %v777
  %v779 = vmul.f32 %v759, 1.442695
  %v780 = vpow.pop %v779
  %v781 = vmul.f32 %v760, 1.442695
  %v782 = vpow.pop %v781
  %v783 = vmul.f32 %v761, 1.442695
  %v784 = vpow.pop %v783
  %v785 = vmul.f32 %v762, 1.442695
  %v786 = vpow.pop %v785
  %v787 = vmul.f32 %v763, 1.442695
  %v788 = vpow.pop %v787
  %v789 = vmul.f32 %v764, 1.442695
  %v790 = vpow.pop %v789
  %v791 = vmul.f32 %v765, 1.442695
  %v792 = vpow.pop %v791
  %v793 = vmul.f32 %v766, 1.442695
  %v794 = vpow.pop %v793
  %v795 = vmul.f32 %v767, 1.442695
  %v796 = vpow.pop %v795
  %v797 = vmul.f32 %v768, 1.442695
  %v798 = vpow.pop %v797
  %v799 = vmul.f32 %v769, 1.442695
  %v800 = vpow.pop %v799
  %v801 = vmul.f32 %v770, 1.442695
  %v802 = vpow.pop %v801
  %v803 = vadd.f32 %v772, 1.0
  %v804 = vadd.f32 %v774, 1.0
  %v805 = vadd.f32 %v776, 1.0
  %v806 = vadd.f32 %v778, 1.0
  %v807 = vadd.f32 %v780, 1.0
  %v808 = vadd.f32 %v782, 1.0
  %v809 = vadd.f32 %v784, 1.0
  %v810 = vadd.f32 %v786, 1.0
  %v811 = vadd.f32 %v788, 1.0
  %v812 = vadd.f32 %v790, 1.0
  %v813 = vadd.f32 %v792, 1.0
  %v814 = vadd.f32 %v794, 1.0
  %v815 = vadd.f32 %v796, 1.0
  %v816 = vadd.f32 %v798, 1.0
  %v817 = vadd.f32 %v800, 1.0
  %v818 = vadd.f32 %v802, 1.0
  %v819 = vrcp.pop %v803
  %v820 = vmul.f32 %v803, %v819
  %v821 = vsub.f32 1.0, %v820
  %v822 = vmul.f32 %v819, %v821
  %v823 = vadd.f32 %v819, %v822
  %vm824 = vweird.f32 %v803
  %vm825 = vweird.f32 %v819
  %vm826 = vmor %vm824, %vm825
  %v827 = vsel %vm826, %v819, %v823
  %v828 = vand.u32 2147483647, %v803
  %vm829 = vcmp.eq.f32.partialorder %v828, 8.507059e+37
  %v830 = vand.u32 %v803, 2147483648
  %v831 = vor.u32 1.1754944e-38, %v830
  %v832 = vsel %vm829, %v831, %v827
  %v833 = vmul.f32 1.0, %v832
  %v834 = vrcp.pop %v804
  %v835 = vmul.f32 %v804, %v834
  %v836 = vsub.f32 1.0, %v835
  %v837 = vmul.f32 %v834, %v836
  %v838 = vadd.f32 %v834, %v837
  %vm839 = vweird.f32 %v804
  %vm840 = vweird.f32 %v834
  %vm841 = vmor %vm839, %vm840
  %v842 = vsel %vm841, %v834, %v838
  %v843 = vand.u32 2147483647, %v804
  %vm844 = vcmp.eq.f32.partialorder %v843, 8.507059e+37
  %v845 = vand.u32 %v804, 2147483648
  %v846 = vor.u32 1.1754944e-38, %v845
  %v847 = vsel %vm844, %v846, %v842
  %v848 = vmul.f32 1.0, %v847
  %v849 = vrcp.pop %v805
  %v850 = vmul.f32 %v805, %v849
  %v851 = vsub.f32 1.0, %v850
  %v852 = vmul.f32 %v849, %v851
  %v853 = vadd.f32 %v849, %v852
  %vm854 = vweird.f32 %v805
  %vm855 = vweird.f32 %v849
  %vm856 = vmor %vm854, %vm855
  %v857 = vsel %vm856, %v849, %v853
  %v858 = vand.u32 2147483647, %v805
  %vm859 = vcmp.eq.f32.partialorder %v858, 8.507059e+37
  %v860 = vand.u32 %v805, 2147483648
  %v861 = vor.u32 1.1754944e-38, %v860
  %v862 = vsel %vm859, %v861, %v857
  %v863 = vmul.f32 1.0, %v862
  %v864 = vrcp.pop %v806
  %v865 = vmul.f32 %v806, %v864
  %v866 = vsub.f32 1.0, %v865
  %v867 = vmul.f32 %v864, %v866
  %v868 = vadd.f32 %v864, %v867
  %vm869 = vweird.f32 %v806
  %vm870 = vweird.f32 %v864
  %vm871 = vmor %vm869, %vm870
  %v872 = vsel %vm871, %v864, %v868
  %v873 = vand.u32 2147483647, %v806
  %vm874 = vcmp.eq.f32.partialorder %v873, 8.507059e+37
  %v875 = vand.u32 %v806, 2147483648
  %v876 = vor.u32 1.1754944e-38, %v875
  %v877 = vsel %vm874, %v876, %v872
  %v878 = vmul.f32 1.0, %v877
  %v879 = vrcp.pop %v807
  %v880 = vmul.f32 %v807, %v879
  %v881 = vsub.f32 1.0, %v880
  %v882 = vmul.f32 %v879, %v881
  %v883 = vadd.f32 %v879, %v882
  %vm884 = vweird.f32 %v807
  %vm885 = vweird.f32 %v879
  %vm886 = vmor %vm884, %vm885
  %v887 = vsel %vm886, %v879, %v883
  %v888 = vand.u32 2147483647, %v807
  %vm889 = vcmp.eq.f32.partialorder %v888, 8.507059e+37
  %v890 = vand.u32 %v807, 2147483648
  %v891 = vor.u32 1.1754944e-38, %v890
  %v892 = vsel %vm889, %v891, %v887
  %v893 = vmul.f32 1.0, %v892
  %v894 = vrcp.pop %v808
  %v895 = vmul.f32 %v808, %v894
  %v896 = vsub.f32 1.0, %v895
  %v897 = vmul.f32 %v894, %v896
  %v898 = vadd.f32 %v894, %v897
  %vm899 = vweird.f32 %v808
  %vm900 = vweird.f32 %v894
  %vm901 = vmor %vm899, %vm900
  %v902 = vsel %vm901, %v894, %v898
  %v903 = vand.u32 2147483647, %v808
  %vm904 = vcmp.eq.f32.partialorder %v903, 8.507059e+37
  %v905 = vand.u32 %v808, 2147483648
  %v906 = vor.u32 1.1754944e-38, %v905
  %v907 = vsel %vm904, %v906, %v902
  %v908 = vmul.f32 1.0, %v907
  %v909 = vrcp.pop %v809
  %v910 = vmul.f32 %v809, %v909
  %v911 = vsub.f32 1.0, %v910
  %v912 = vmul.f32 %v909, %v911
  %v913 = vadd.f32 %v909, %v912
  %vm914 = vweird.f32 %v809
  %vm915 = vweird.f32 %v909
  %vm916 = vmor %vm914, %vm915
  %v917 = vsel %vm916, %v909, %v913
  %v918 = vand.u32 2147483647, %v809
  %vm919 = vcmp.eq.f32.partialorder %v918, 8.507059e+37
  %v920 = vand.u32 %v809, 2147483648
  %v921 = vor.u32 1.1754944e-38, %v920
  %v922 = vsel %vm919, %v921, %v917
  %v923 = vmul.f32 1.0, %v922
  %v924 = vrcp.pop %v810
  %v925 = vmul.f32 %v810, %v924
  %v926 = vsub.f32 1.0, %v925
  %v927 = vmul.f32 %v924, %v926
  %v928 = vadd.f32 %v924, %v927
  %vm929 = vweird.f32 %v810
  %vm930 = vweird.f32 %v924
  %vm931 = vmor %vm929, %vm930
  %v932 = vsel %vm931, %v924, %v928
  %v933 = vand.u32 2147483647, %v810
  %vm934 = vcmp.eq.f32.partialorder %v933, 8.507059e+37
  %v935 = vand.u32 %v810, 2147483648
  %v936 = vor.u32 1.1754944e-38, %v935
  %v937 = vsel %vm934, %v936, %v932
  %v938 = vmul.f32 1.0, %v937
  %v939 = vrcp.pop %v811
  %v940 = vmul.f32 %v811, %v939
  %v941 = vsub.f32 1.0, %v940
  %v942 = vmul.f32 %v939, %v941
  %v943 = vadd.f32 %v939, %v942
  %vm944 = vweird.f32 %v811
  %vm945 = vweird.f32 %v939
  %vm946 = vmor %vm944, %vm945
  %v947 = vsel %vm946, %v939, %v943
  %v948 = vand.u32 2147483647, %v811
  %vm949 = vcmp.eq.f32.partialorder %v948, 8.507059e+37
  %v950 = vand.u32 %v811, 2147483648
  %v951 = vor.u32 1.1754944e-38, %v950
  %v952 = vsel %vm949, %v951, %v947
  %v953 = vmul.f32 1.0, %v952
  %v954 = vrcp.pop %v812
  %v955 = vmul.f32 %v812, %v954
  %v956 = vsub.f32 1.0, %v955
  %v957 = vmul.f32 %v954, %v956
  %v958 = vadd.f32 %v954, %v957
  %vm959 = vweird.f32 %v812
  %vm960 = vweird.f32 %v954
  %vm961 = vmor %vm959, %vm960
  %v962 = vsel %vm961, %v954, %v958
  %v963 = vand.u32 2147483647, %v812
  %vm964 = vcmp.eq.f32.partialorder %v963, 8.507059e+37
  %v965 = vand.u32 %v812, 2147483648
  %v966 = vor.u32 1.1754944e-38, %v965
  %v967 = vsel %vm964, %v966, %v962
  %v968 = vmul.f32 1.0, %v967
  %v969 = vrcp.pop %v813
  %v970 = vmul.f32 %v813, %v969
  %v971 = vsub.f32 1.0, %v970
  %v972 = vmul.f32 %v969, %v971
  %v973 = vadd.f32 %v969, %v972
  %vm974 = vweird.f32 %v813
  %vm975 = vweird.f32 %v969
  %vm976 = vmor %vm974, %vm975
  %v977 = vsel %vm976, %v969, %v973
  %v978 = vand.u32 2147483647, %v813
  %vm979 = vcmp.eq.f32.partialorder %v978, 8.507059e+37
  %v980 = vand.u32 %v813, 2147483648
  %v981 = vor.u32 1.1754944e-38, %v980
  %v982 = vsel %vm979, %v981, %v977
  %v983 = vmul.f32 1.0, %v982
  %v984 = vrcp.pop %v814
  %v985 = vmul.f32 %v814, %v984
  %v986 = vsub.f32 1.0, %v985
  %v987 = vmul.f32 %v984, %v986
  %v988 = vadd.f32 %v984, %v987
  %vm989 = vweird.f32 %v814
  %vm990 = vweird.f32 %v984
  %vm991 = vmor %vm989, %vm990
  %v992 = vsel %vm991, %v984, %v988
  %v993 = vand.u32 2147483647, %v814
  %vm994 = vcmp.eq.f32.partialorder %v993, 8.507059e+37
  %v995 = vand.u32 %v814, 2147483648
  %v996 = vor.u32 1.1754944e-38, %v995
  %v997 = vsel %vm994, %v996, %v992
  %v998 = vmul.f32 1.0, %v997
  %v999 = vrcp.pop %v815
  %v1000 = vmul.f32 %v815, %v999
  %v1001 = vsub.f32 1.0, %v1000
  %v1002 = vmul.f32 %v999, %v1001
  %v1003 = vadd.f32 %v999, %v1002
  %vm1004 = vweird.f32 %v815
  %vm1005 = vweird.f32 %v999
  %vm1006 = vmor %vm1004, %vm1005
  %v1007 = vsel %vm1006, %v999, %v1003
  %v1008 = vand.u32 2147483647, %v815
  %vm1009 = vcmp.eq.f32.partialorder %v1008, 8.507059e+37
  %v1010 = vand.u32 %v815, 2147483648
  %v1011 = vor.u32 1.1754944e-38, %v1010
  %v1012 = vsel %vm1009, %v1011, %v1007
  %v1013 = vmul.f32 1.0, %v1012
  %v1014 = vrcp.pop %v816
  %v1015 = vmul.f32 %v816, %v1014
  %v1016 = vsub.f32 1.0, %v1015
  %v1017 = vmul.f32 %v1014, %v1016
  %v1018 = vadd.f32 %v1014, %v1017
  %vm1019 = vweird.f32 %v816
  %vm1020 = vweird.f32 %v1014
  %vm1021 = vmor %vm1019, %vm1020
  %v1022 = vsel %vm1021, %v1014, %v1018
  %v1023 = vand.u32 2147483647, %v816
  %vm1024 = vcmp.eq.f32.partialorder %v1023, 8.507059e+37
  %v1025 = vand.u32 %v816, 2147483648
  %v1026 = vor.u32 1.1754944e-38, %v1025
  %v1027 = vsel %vm1024, %v1026, %v1022
  %v1028 = vmul.f32 1.0, %v1027
  %v1029 = vrcp.pop %v817
  %v1030 = vmul.f32 %v817, %v1029
  %v1031 = vsub.f32 1.0, %v1030
  %v1032 = vmul.f32 %v1029, %v1031
  %v1033 = vadd.f32 %v1029, %v1032
  %vm1034 = vweird.f32 %v817
  %vm1035 = vweird.f32 %v1029
  %vm1036 = vmor %vm1034, %vm1035
  %v1037 = vsel %vm1036, %v1029, %v1033
  %v1038 = vand.u32 2147483647, %v817
  %vm1039 = vcmp.eq.f32.partialorder %v1038, 8.507059e+37
  %v1040 = vand.u32 %v817, 2147483648
  %v1041 = vor.u32 1.1754944e-38, %v1040
  %v1042 = vsel %vm1039, %v1041, %v1037
  %v1043 = vmul.f32 1.0, %v1042
  %v1044 = vrcp.pop %v818
  %v1045 = vmul.f32 %v818, %v1044
  %v1046 = vsub.f32 1.0, %v1045
  %v1047 = vmul.f32 %v1044, %v1046
  %v1048 = vadd.f32 %v1044, %v1047
  %vm1049 = vweird.f32 %v818
  %vm1050 = vweird.f32 %v1044
  %vm1051 = vmor %vm1049, %vm1050
  %v1052 = vsel %vm1051, %v1044, %v1048
  %v1053 = vand.u32 2147483647, %v818
  %vm1054 = vcmp.eq.f32.partialorder %v1053, 8.507059e+37
  %v1055 = vand.u32 %v818, 2147483648
  %v1056 = vor.u32 1.1754944e-38, %v1055
  %v1057 = vsel %vm1054, %v1056, %v1052
  %v1058 = vmul.f32 1.0, %v1057
  %v1059 = vxor.u32 %v526, 2147483648
  %v1060 = vxor.u32 %v529, 2147483648
  %v1061 = vxor.u32 %v558, 2147483648
  %v1062 = vxor.u32 %v561, 2147483648
  %v1063 = vxor.u32 %v590, 2147483648
  %v1064 = vxor.u32 %v593, 2147483648
  %v1065 = vxor.u32 %v622, 2147483648
  %v1066 = vxor.u32 %v625, 2147483648
  %v1067 = vxor.u32 %v654, 2147483648
  %v1068 = vxor.u32 %v657, 2147483648
  %v1069 = vxor.u32 %v686, 2147483648
  %v1070 = vxor.u32 %v689, 2147483648
  %v1071 = vxor.u32 %v718, 2147483648
  %v1072 = vxor.u32 %v721, 2147483648
  %v1073 = vxor.u32 %v750, 2147483648
  %v1074 = vxor.u32 %v753, 2147483648
  %v1075 = vmul.f32 %v1059, 1.442695
  %v1076 = vpow.pop %v1075
  %v1077 = vmul.f32 %v1060, 1.442695
  %v1078 = vpow.pop %v1077
  %v1079 = vmul.f32 %v1061, 1.442695
  %v1080 = vpow.pop %v1079
  %v1081 = vmul.f32 %v1062, 1.442695
  %v1082 = vpow.pop %v1081
  %v1083 = vmul.f32 %v1063, 1.442695
  %v1084 = vpow.pop %v1083
  %v1085 = vmul.f32 %v1064, 1.442695
  %v1086 = vpow.pop %v1085
  %v1087 = vmul.f32 %v1065, 1.442695
  %v1088 = vpow.pop %v1087
  %v1089 = vmul.f32 %v1066, 1.442695
  %v1090 = vpow.pop %v1089
  %v1091 = vmul.f32 %v1067, 1.442695
  %v1092 = vpow.pop %v1091
  %v1093 = vmul.f32 %v1068, 1.442695
  %v1094 = vpow.pop %v1093
  %v1095 = vmul.f32 %v1069, 1.442695
  %v1096 = vpow.pop %v1095
  %v1097 = vmul.f32 %v1070, 1.442695
  %v1098 = vpow.pop %v1097
  %v1099 = vmul.f32 %v1071, 1.442695
  %v1100 = vpow.pop %v1099
  %v1101 = vmul.f32 %v1072, 1.442695
  %v1102 = vpow.pop %v1101
  %v1103 = vmul.f32 %v1073, 1.442695
  %v1104 = vpow.pop %v1103
  %v1105 = vmul.f32 %v1074, 1.442695
  %v1106 = vpow.pop %v1105
  %v1107 = vadd.f32 %v1076, 1.0
  %v1108 = vadd.f32 %v1078, 1.0
  %v1109 = vadd.f32 %v1080, 1.0
  %v1110 = vadd.f32 %v1082, 1.0
  %v1111 = vadd.f32 %v1084, 1.0
  %v1112 = vadd.f32 %v1086, 1.0
  %v1113 = vadd.f32 %v1088, 1.0
  %v1114 = vadd.f32 %v1090, 1.0
  %v1115 = vadd.f32 %v1092, 1.0
  %v1116 = vadd.f32 %v1094, 1.0
  %v1117 = vadd.f32 %v1096, 1.0
  %v1118 = vadd.f32 %v1098, 1.0
  %v1119 = vadd.f32 %v1100, 1.0
  %v1120 = vadd.f32 %v1102, 1.0
  %v1121 = vadd.f32 %v1104, 1.0
  %v1122 = vadd.f32 %v1106, 1.0
  %v1123 = vrcp.pop %v1107
  %v1124 = vmul.f32 %v1107, %v1123
  %v1125 = vsub.f32 1.0, %v1124
  %v1126 = vmul.f32 %v1123, %v1125
  %v1127 = vadd.f32 %v1123, %v1126
  %vm1128 = vweird.f32 %v1107
  %vm1129 = vweird.f32 %v1123
  %vm1130 = vmor %vm1128, %vm1129
  %v1131 = vsel %vm1130, %v1123, %v1127
  %v1132 = vand.u32 2147483647, %v1107
  %vm1133 = vcmp.eq.f32.partialorder %v1132, 8.507059e+37
  %v1134 = vand.u32 %v1107, 2147483648
  %v1135 = vor.u32 1.1754944e-38, %v1134
  %v1136 = vsel %vm1133, %v1135, %v1131
  %v1137 = vmul.f32 1.0, %v1136
  %v1138 = vrcp.pop %v1108
  %v1139 = vmul.f32 %v1108, %v1138
  %v1140 = vsub.f32 1.0, %v1139
  %v1141 = vmul.f32 %v1138, %v1140
  %v1142 = vadd.f32 %v1138, %v1141
  %vm1143 = vweird.f32 %v1108
  %vm1144 = vweird.f32 %v1138
  %vm1145 = vmor %vm1143, %vm1144
  %v1146 = vsel %vm1145, %v1138, %v1142
  %v1147 = vand.u32 2147483647, %v1108
  %vm1148 = vcmp.eq.f32.partialorder %v1147, 8.507059e+37
  %v1149 = vand.u32 %v1108, 2147483648
  %v1150 = vor.u32 1.1754944e-38, %v1149
  %v1151 = vsel %vm1148, %v1150, %v1146
  %v1152 = vmul.f32 1.0, %v1151
  %v1153 = vrcp.pop %v1109
  %v1154 = vmul.f32 %v1109, %v1153
  %v1155 = vsub.f32 1.0, %v1154
  %v1156 = vmul.f32 %v1153, %v1155
  %v1157 = vadd.f32 %v1153, %v1156
  %vm1158 = vweird.f32 %v1109
  %vm1159 = vweird.f32 %v1153
  %vm1160 = vmor %vm1158, %vm1159
  %v1161 = vsel %vm1160, %v1153, %v1157
  %v1162 = vand.u32 2147483647, %v1109
  %vm1163 = vcmp.eq.f32.partialorder %v1162, 8.507059e+37
  %v1164 = vand.u32 %v1109, 2147483648
  %v1165 = vor.u32 1.1754944e-38, %v1164
  %v1166 = vsel %vm1163, %v1165, %v1161
  %v1167 = vmul.f32 1.0, %v1166
  %v1168 = vrcp.pop %v1110
  %v1169 = vmul.f32 %v1110, %v1168
  %v1170 = vsub.f32 1.0, %v1169
  %v1171 = vmul.f32 %v1168, %v1170
  %v1172 = vadd.f32 %v1168, %v1171
  %vm1173 = vweird.f32 %v1110
  %vm1174 = vweird.f32 %v1168
  %vm1175 = vmor %vm1173, %vm1174
  %v1176 = vsel %vm1175, %v1168, %v1172
  %v1177 = vand.u32 2147483647, %v1110
  %vm1178 = vcmp.eq.f32.partialorder %v1177, 8.507059e+37
  %v1179 = vand.u32 %v1110, 2147483648
  %v1180 = vor.u32 1.1754944e-38, %v1179
  %v1181 = vsel %vm1178, %v1180, %v1176
  %v1182 = vmul.f32 1.0, %v1181
  %v1183 = vrcp.pop %v1111
  %v1184 = vmul.f32 %v1111, %v1183
  %v1185 = vsub.f32 1.0, %v1184
  %v1186 = vmul.f32 %v1183, %v1185
  %v1187 = vadd.f32 %v1183, %v1186
  %vm1188 = vweird.f32 %v1111
  %vm1189 = vweird.f32 %v1183
  %vm1190 = vmor %vm1188, %vm1189
  %v1191 = vsel %vm1190, %v1183, %v1187
  %v1192 = vand.u32 2147483647, %v1111
  %vm1193 = vcmp.eq.f32.partialorder %v1192, 8.507059e+37
  %v1194 = vand.u32 %v1111, 2147483648
  %v1195 = vor.u32 1.1754944e-38, %v1194
  %v1196 = vsel %vm1193, %v1195, %v1191
  %v1197 = vmul.f32 1.0, %v1196
  %v1198 = vrcp.pop %v1112
  %v1199 = vmul.f32 %v1112, %v1198
  %v1200 = vsub.f32 1.0, %v1199
  %v1201 = vmul.f32 %v1198, %v1200
  %v1202 = vadd.f32 %v1198, %v1201
  %vm1203 = vweird.f32 %v1112
  %vm1204 = vweird.f32 %v1198
  %vm1205 = vmor %vm1203, %vm1204
  %v1206 = vsel %vm1205, %v1198, %v1202
  %v1207 = vand.u32 2147483647, %v1112
  %vm1208 = vcmp.eq.f32.partialorder %v1207, 8.507059e+37
  %v1209 = vand.u32 %v1112, 2147483648
  %v1210 = vor.u32 1.1754944e-38, %v1209
  %v1211 = vsel %vm1208, %v1210, %v1206
  %v1212 = vmul.f32 1.0, %v1211
  %v1213 = vrcp.pop %v1113
  %v1214 = vmul.f32 %v1113, %v1213
  %v1215 = vsub.f32 1.0, %v1214
  %v1216 = vmul.f32 %v1213, %v1215
  %v1217 = vadd.f32 %v1213, %v1216
  %vm1218 = vweird.f32 %v1113
  %vm1219 = vweird.f32 %v1213
  %vm1220 = vmor %vm1218, %vm1219
  %v1221 = vsel %vm1220, %v1213, %v1217
  %v1222 = vand.u32 2147483647, %v1113
  %vm1223 = vcmp.eq.f32.partialorder %v1222, 8.507059e+37
  %v1224 = vand.u32 %v1113, 2147483648
  %v1225 = vor.u32 1.1754944e-38, %v1224
  %v1226 = vsel %vm1223, %v1225, %v1221
  %v1227 = vmul.f32 1.0, %v1226
  %v1228 = vrcp.pop %v1114
  %v1229 = vmul.f32 %v1114, %v1228
  %v1230 = vsub.f32 1.0, %v1229
  %v1231 = vmul.f32 %v1228, %v1230
  %v1232 = vadd.f32 %v1228, %v1231
  %vm1233 = vweird.f32 %v1114
  %vm1234 = vweird.f32 %v1228
  %vm1235 = vmor %vm1233, %vm1234
  %v1236 = vsel %vm1235, %v1228, %v1232
  %v1237 = vand.u32 2147483647, %v1114
  %vm1238 = vcmp.eq.f32.partialorder %v1237, 8.507059e+37
  %v1239 = vand.u32 %v1114, 2147483648
  %v1240 = vor.u32 1.1754944e-38, %v1239
  %v1241 = vsel %vm1238, %v1240, %v1236
  %v1242 = vmul.f32 1.0, %v1241
  %v1243 = vrcp.pop %v1115
  %v1244 = vmul.f32 %v1115, %v1243
  %v1245 = vsub.f32 1.0, %v1244
  %v1246 = vmul.f32 %v1243, %v1245
  %v1247 = vadd.f32 %v1243, %v1246
  %vm1248 = vweird.f32 %v1115
  %vm1249 = vweird.f32 %v1243
  %vm1250 = vmor %vm1248, %vm1249
  %v1251 = vsel %vm1250, %v1243, %v1247
  %v1252 = vand.u32 2147483647, %v1115
  %vm1253 = vcmp.eq.f32.partialorder %v1252, 8.507059e+37
  %v1254 = vand.u32 %v1115, 2147483648
  %v1255 = vor.u32 1.1754944e-38, %v1254
  %v1256 = vsel %vm1253, %v1255, %v1251
  %v1257 = vmul.f32 1.0, %v1256
  %v1258 = vrcp.pop %v1116
  %v1259 = vmul.f32 %v1116, %v1258
  %v1260 = vsub.f32 1.0, %v1259
  %v1261 = vmul.f32 %v1258, %v1260
  %v1262 = vadd.f32 %v1258, %v1261
  %vm1263 = vweird.f32 %v1116
  %vm1264 = vweird.f32 %v1258
  %vm1265 = vmor %vm1263, %vm1264
  %v1266 = vsel %vm1265, %v1258, %v1262
  %v1267 = vand.u32 2147483647, %v1116
  %vm1268 = vcmp.eq.f32.partialorder %v1267, 8.507059e+37
  %v1269 = vand.u32 %v1116, 2147483648
  %v1270 = vor.u32 1.1754944e-38, %v1269
  %v1271 = vsel %vm1268, %v1270, %v1266
  %v1272 = vmul.f32 1.0, %v1271
  %v1273 = vrcp.pop %v1117
  %v1274 = vmul.f32 %v1117, %v1273
  %v1275 = vsub.f32 1.0, %v1274
  %v1276 = vmul.f32 %v1273, %v1275
  %v1277 = vadd.f32 %v1273, %v1276
  %vm1278 = vweird.f32 %v1117
  %vm1279 = vweird.f32 %v1273
  %vm1280 = vmor %vm1278, %vm1279
  %v1281 = vsel %vm1280, %v1273, %v1277
  %v1282 = vand.u32 2147483647, %v1117
  %vm1283 = vcmp.eq.f32.partialorder %v1282, 8.507059e+37
  %v1284 = vand.u32 %v1117, 2147483648
  %v1285 = vor.u32 1.1754944e-38, %v1284
  %v1286 = vsel %vm1283, %v1285, %v1281
  %v1287 = vmul.f32 1.0, %v1286
  %v1288 = vrcp.pop %v1118
  %v1289 = vmul.f32 %v1118, %v1288
  %v1290 = vsub.f32 1.0, %v1289
  %v1291 = vmul.f32 %v1288, %v1290
  %v1292 = vadd.f32 %v1288, %v1291
  %vm1293 = vweird.f32 %v1118
  %vm1294 = vweird.f32 %v1288
  %vm1295 = vmor %vm1293, %vm1294
  %v1296 = vsel %vm1295, %v1288, %v1292
  %v1297 = vand.u32 2147483647, %v1118
  %vm1298 = vcmp.eq.f32.partialorder %v1297, 8.507059e+37
  %v1299 = vand.u32 %v1118, 2147483648
  %v1300 = vor.u32 1.1754944e-38, %v1299
  %v1301 = vsel %vm1298, %v1300, %v1296
  %v1302 = vmul.f32 1.0, %v1301
  %v1303 = vrcp.pop %v1119
  %v1304 = vmul.f32 %v1119, %v1303
  %v1305 = vsub.f32 1.0, %v1304
  %v1306 = vmul.f32 %v1303, %v1305
  %v1307 = vadd.f32 %v1303, %v1306
  %vm1308 = vweird.f32 %v1119
  %vm1309 = vweird.f32 %v1303
  %vm1310 = vmor %vm1308, %vm1309
  %v1311 = vsel %vm1310, %v1303, %v1307
  %v1312 = vand.u32 2147483647, %v1119
  %vm1313 = vcmp.eq.f32.partialorder %v1312, 8.507059e+37
  %v1314 = vand.u32 %v1119, 2147483648
  %v1315 = vor.u32 1.1754944e-38, %v1314
  %v1316 = vsel %vm1313, %v1315, %v1311
  %v1317 = vmul.f32 1.0, %v1316
  %v1318 = vrcp.pop %v1120
  %v1319 = vmul.f32 %v1120, %v1318
  %v1320 = vsub.f32 1.0, %v1319
  %v1321 = vmul.f32 %v1318, %v1320
  %v1322 = vadd.f32 %v1318, %v1321
  %vm1323 = vweird.f32 %v1120
  %vm1324 = vweird.f32 %v1318
  %vm1325 = vmor %vm1323, %vm1324
  %v1326 = vsel %vm1325, %v1318, %v1322
  %v1327 = vand.u32 2147483647, %v1120
  %vm1328 = vcmp.eq.f32.partialorder %v1327, 8.507059e+37
  %v1329 = vand.u32 %v1120, 2147483648
  %v1330 = vor.u32 1.1754944e-38, %v1329
  %v1331 = vsel %vm1328, %v1330, %v1326
  %v1332 = vmul.f32 1.0, %v1331
  %v1333 = vrcp.pop %v1121
  %v1334 = vmul.f32 %v1121, %v1333
  %v1335 = vsub.f32 1.0, %v1334
  %v1336 = vmul.f32 %v1333, %v1335
  %v1337 = vadd.f32 %v1333, %v1336
  %vm1338 = vweird.f32 %v1121
  %vm1339 = vweird.f32 %v1333
  %vm1340 = vmor %vm1338, %vm1339
  %v1341 = vsel %vm1340, %v1333, %v1337
  %v1342 = vand.u32 2147483647, %v1121
  %vm1343 = vcmp.eq.f32.partialorder %v1342, 8.507059e+37
  %v1344 = vand.u32 %v1121, 2147483648
  %v1345 = vor.u32 1.1754944e-38, %v1344
  %v1346 = vsel %vm1343, %v1345, %v1341
  %v1347 = vmul.f32 1.0, %v1346
  %v1348 = vrcp.pop %v1122
  %v1349 = vmul.f32 %v1122, %v1348
  %v1350 = vsub.f32 1.0, %v1349
  %v1351 = vmul.f32 %v1348, %v1350
  %v1352 = vadd.f32 %v1348, %v1351
  %vm1353 = vweird.f32 %v1122
  %vm1354 = vweird.f32 %v1348
  %vm1355 = vmor %vm1353, %vm1354
  %v1356 = vsel %vm1355, %v1348, %v1352
  %v1357 = vand.u32 2147483647, %v1122
  %vm1358 = vcmp.eq.f32.partialorder %v1357, 8.507059e+37
  %v1359 = vand.u32 %v1122, 2147483648
  %v1360 = vor.u32 1.1754944e-38, %v1359
  %v1361 = vsel %vm1358, %v1360, %v1356
  %v1362 = vmul.f32 1.0, %v1361
  %v1363 = vld [vmem:[%s3] sm:$0xff]
  %v1364 = vld [vmem:[%s3 + $0x8] sm:$0xff]
  %v1365 = vld [vmem:[%s3 + $0x10] sm:$0xff]
  %v1366 = vld [vmem:[%s3 + $0x18] sm:$0xff]
  %v1368 = vsel %vm253, %v833, 0
  %v1371 = vsel %vm253, %v848, 0
  %v1374 = vsel %vm253, %v863, 0
  %v1377 = vsel %vm253, %v878, 0
  %v1380 = vsel %vm253, %v893, 0
  %v1383 = vsel %vm253, %v908, 0
  %v1386 = vsel %vm253, %v923, 0
  %v1389 = vsel %vm253, %v938, 0
  %v1392 = vsel %vm253, %v953, 0
  %v1395 = vsel %vm253, %v968, 0
  %v1398 = vsel %vm253, %v983, 0
  %v1401 = vsel %vm253, %v998, 0
  %v1404 = vsel %vm253, %v1013, 0
  %v1407 = vsel %vm253, %v1028, 0
  %v1410 = vsel %vm253, %v1043, 0
  %v1413 = vsel %vm253, %v1058, 0
  %1415 = vmatpush.msra.mxu0 0.0
  %1416 = vmatpush.msra.mxu0 0.0
  %1417 = vmatpush.msra.mxu0 0.0
  %1418 = vmatpush.msra.mxu0 0.0
  %1419 = vmatpush.msra.mxu0 0.0
  %1420 = vmatpush.msra.mxu0 0.0
  %1421 = vmatpush.msra.mxu0 0.0
  %1422 = vmatpush.msra.mxu0 0.0
  %1423 = vmatpush.msra.mxu0 0.0
  %1424 = vmatpush.msra.mxu0 0.0
  %1425 = vmatpush.msra.mxu0 0.0
  %1426 = vmatpush.msra.mxu0 0.0
  %1427 = vmatpush.msra.mxu0 0.0
  %1428 = vmatpush.msra.mxu0 0.0
  %1429 = vmatpush.msra.mxu0 %v1365
  %1430 = vmatpush.msra.mxu0 %v1363
  %1431 = vmatmul.f32.gmra.mxu0 %v1368
  %v1432 = vpop.f32.mrf.mxu0
  %v1433 = vadd.f32 0.0, %v1432
  %1434 = vmatmul.f32.gmra.mxu0 %v1371
  %v1435 = vpop.f32.mrf.mxu0
  %v1436 = vadd.f32 0.0, %v1435
  %1437 = vmatmul.f32.gmra.mxu0 %v1374
  %v1438 = vpop.f32.mrf.mxu0
  %v1439 = vadd.f32 0.0, %v1438
  %1440 = vmatmul.f32.gmra.mxu0 %v1377
  %v1441 = vpop.f32.mrf.mxu0
  %v1442 = vadd.f32 0.0, %v1441
  %1443 = vmatmul.f32.gmra.mxu0 %v1380
  %v1444 = vpop.f32.mrf.mxu0
  %v1445 = vadd.f32 0.0, %v1444
  %1446 = vmatmul.f32.gmra.mxu0 %v1383
  %v1447 = vpop.f32.mrf.mxu0
  %v1448 = vadd.f32 0.0, %v1447
  %1449 = vmatmul.f32.gmra.mxu0 %v1386
  %v1450 = vpop.f32.mrf.mxu0
  %v1451 = vadd.f32 0.0, %v1450
  %1452 = vmatmul.f32.gmra.mxu0 %v1389
  %v1453 = vpop.f32.mrf.mxu0
  %v1454 = vadd.f32 0.0, %v1453
  %1455 = vmatmul.f32.gmra.mxu0 %v1392
  %v1456 = vpop.f32.mrf.mxu0
  %v1457 = vadd.f32 0.0, %v1456
  %1458 = vmatmul.f32.gmra.mxu0 %v1395
  %v1459 = vpop.f32.mrf.mxu0
  %v1460 = vadd.f32 0.0, %v1459
  %1461 = vmatmul.f32.gmra.mxu0 %v1398
  %v1462 = vpop.f32.mrf.mxu0
  %v1463 = vadd.f32 0.0, %v1462
  %1464 = vmatmul.f32.gmra.mxu0 %v1401
  %v1465 = vpop.f32.mrf.mxu0
  %v1466 = vadd.f32 0.0, %v1465
  %1467 = vmatmul.f32.gmra.mxu0 %v1404
  %v1468 = vpop.f32.mrf.mxu0
  %v1469 = vadd.f32 0.0, %v1468
  %1470 = vmatmul.f32.gmra.mxu0 %v1407
  %v1471 = vpop.f32.mrf.mxu0
  %v1472 = vadd.f32 0.0, %v1471
  %1473 = vmatmul.f32.gmra.mxu0 %v1410
  %v1474 = vpop.f32.mrf.mxu0
  %v1475 = vadd.f32 0.0, %v1474
  %1476 = vmatmul.f32.gmra.mxu0 %v1413
  %v1477 = vpop.f32.mrf.mxu0
  %v1478 = vadd.f32 0.0, %v1477
  %1479 = vdwg.mxu0
  %1480 = vmatpush.msra.mxu0 0.0
  %1481 = vmatpush.msra.mxu0 0.0
  %1482 = vmatpush.msra.mxu0 0.0
  %1483 = vmatpush.msra.mxu0 0.0
  %1484 = vmatpush.msra.mxu0 0.0
  %1485 = vmatpush.msra.mxu0 0.0
  %1486 = vmatpush.msra.mxu0 0.0
  %1487 = vmatpush.msra.mxu0 0.0
  %1488 = vmatpush.msra.mxu0 0.0
  %1489 = vmatpush.msra.mxu0 0.0
  %1490 = vmatpush.msra.mxu0 0.0
  %1491 = vmatpush.msra.mxu0 0.0
  %1492 = vmatpush.msra.mxu0 0.0
  %1493 = vmatpush.msra.mxu0 0.0
  %1494 = vmatpush.msra.mxu0 %v1366
  %1495 = vmatpush.msra.mxu0 %v1364
  %1496 = vmatmul.f32.gmra.mxu0 %v1368
  %v1497 = vpop.f32.mrf.mxu0
  %v1498 = vadd.f32 0.0, %v1497
  %1499 = vmatmul.f32.gmra.mxu0 %v1371
  %v1500 = vpop.f32.mrf.mxu0
  %v1501 = vadd.f32 0.0, %v1500
  %1502 = vmatmul.f32.gmra.mxu0 %v1374
  %v1503 = vpop.f32.mrf.mxu0
  %v1504 = vadd.f32 0.0, %v1503
  %1505 = vmatmul.f32.gmra.mxu0 %v1377
  %v1506 = vpop.f32.mrf.mxu0
  %v1507 = vadd.f32 0.0, %v1506
  %1508 = vmatmul.f32.gmra.mxu0 %v1380
  %v1509 = vpop.f32.mrf.mxu0
  %v1510 = vadd.f32 0.0, %v1509
  %1511 = vmatmul.f32.gmra.mxu0 %v1383
  %v1512 = vpop.f32.mrf.mxu0
  %v1513 = vadd.f32 0.0, %v1512
  %1514 = vmatmul.f32.gmra.mxu0 %v1386
  %v1515 = vpop.f32.mrf.mxu0
  %v1516 = vadd.f32 0.0, %v1515
  %1517 = vmatmul.f32.gmra.mxu0 %v1389
  %v1518 = vpop.f32.mrf.mxu0
  %v1519 = vadd.f32 0.0, %v1518
  %1520 = vmatmul.f32.gmra.mxu0 %v1392
  %v1521 = vpop.f32.mrf.mxu0
  %v1522 = vadd.f32 0.0, %v1521
  %1523 = vmatmul.f32.gmra.mxu0 %v1395
  %v1524 = vpop.f32.mrf.mxu0
  %v1525 = vadd.f32 0.0, %v1524
  %1526 = vmatmul.f32.gmra.mxu0 %v1398
  %v1527 = vpop.f32.mrf.mxu0
  %v1528 = vadd.f32 0.0, %v1527
  %1529 = vmatmul.f32.gmra.mxu0 %v1401
  %v1530 = vpop.f32.mrf.mxu0
  %v1531 = vadd.f32 0.0, %v1530
  %1532 = vmatmul.f32.gmra.mxu0 %v1404
  %v1533 = vpop.f32.mrf.mxu0
  %v1534 = vadd.f32 0.0, %v1533
  %1535 = vmatmul.f32.gmra.mxu0 %v1407
  %v1536 = vpop.f32.mrf.mxu0
  %v1537 = vadd.f32 0.0, %v1536
  %1538 = vmatmul.f32.gmra.mxu0 %v1410
  %v1539 = vpop.f32.mrf.mxu0
  %v1540 = vadd.f32 0.0, %v1539
  %1541 = vmatmul.f32.gmra.mxu0 %v1413
  %v1542 = vpop.f32.mrf.mxu0
  %v1543 = vadd.f32 0.0, %v1542
  %1544 = vdwg.mxu0
  %v1545 = vld [vmem:[%s4] sm:$0xff]
  %v1546 = vld [vmem:[%s4 + $0x8] sm:$0xff]
  %v1547 = vld [vmem:[%s4 + $0x10] sm:$0xff]
  %v1548 = vld [vmem:[%s4 + $0x18] sm:$0xff]
  %1565 = vrot.lane.b32.xlu0 %v1137, 112
  %v1566 = vpop.permute.xlu0 %1565
  %1567 = vrot.lane.b32.xlu0 %v1152, 112
  %v1568 = vpop.permute.xlu0 %1567
  %1569 = vrot.lane.b32.xlu0 %v1167, 112
  %v1570 = vpop.permute.xlu0 %1569
  %1571 = vrot.lane.b32.xlu0 %v1182, 112
  %v1572 = vpop.permute.xlu0 %1571
  %1573 = vrot.lane.b32.xlu0 %v1197, 112
  %v1574 = vpop.permute.xlu0 %1573
  %1575 = vrot.lane.b32.xlu0 %v1212, 112
  %v1576 = vpop.permute.xlu0 %1575
  %1577 = vrot.lane.b32.xlu0 %v1227, 112
  %v1578 = vpop.permute.xlu0 %1577
  %1579 = vrot.lane.b32.xlu0 %v1242, 112
  %v1580 = vpop.permute.xlu0 %1579
  %1581 = vrot.lane.b32.xlu0 %v1257, 112
  %v1582 = vpop.permute.xlu0 %1581
  %1583 = vrot.lane.b32.xlu0 %v1272, 112
  %v1584 = vpop.permute.xlu0 %1583
  %1585 = vrot.lane.b32.xlu0 %v1287, 112
  %v1586 = vpop.permute.xlu0 %1585
  %1587 = vrot.lane.b32.xlu0 %v1302, 112
  %v1588 = vpop.permute.xlu0 %1587
  %1589 = vrot.lane.b32.xlu0 %v1317, 112
  %v1590 = vpop.permute.xlu0 %1589
  %1591 = vrot.lane.b32.xlu0 %v1332, 112
  %v1592 = vpop.permute.xlu0 %1591
  %1593 = vrot.lane.b32.xlu0 %v1347, 112
  %v1594 = vpop.permute.xlu0 %1593
  %1595 = vrot.lane.b32.xlu0 %v1362, 112
  %v1596 = vpop.permute.xlu0 %1595
  %v1597 = vsel %vm253, %v1566, 0
  %v1599 = vsel %vm253, %v1568, 0
  %v1601 = vsel %vm253, %v1570, 0
  %v1603 = vsel %vm253, %v1572, 0
  %v1605 = vsel %vm253, %v1574, 0
  %v1607 = vsel %vm253, %v1576, 0
  %v1609 = vsel %vm253, %v1578, 0
  %v1611 = vsel %vm253, %v1580, 0
  %v1613 = vsel %vm253, %v1582, 0
  %v1615 = vsel %vm253, %v1584, 0
  %v1617 = vsel %vm253, %v1586, 0
  %v1619 = vsel %vm253, %v1588, 0
  %v1621 = vsel %vm253, %v1590, 0
  %v1623 = vsel %vm253, %v1592, 0
  %v1625 = vsel %vm253, %v1594, 0
  %v1627 = vsel %vm253, %v1596, 0
  %1629 = vmatpush.msra.mxu0 0.0
  %1630 = vmatpush.msra.mxu0 0.0
  %1631 = vmatpush.msra.mxu0 0.0
  %1632 = vmatpush.msra.mxu0 0.0
  %1633 = vmatpush.msra.mxu0 0.0
  %1634 = vmatpush.msra.mxu0 0.0
  %1635 = vmatpush.msra.mxu0 0.0
  %1636 = vmatpush.msra.mxu0 0.0
  %1637 = vmatpush.msra.mxu0 0.0
  %1638 = vmatpush.msra.mxu0 0.0
  %1639 = vmatpush.msra.mxu0 0.0
  %1640 = vmatpush.msra.mxu0 0.0
  %1641 = vmatpush.msra.mxu0 0.0
  %1642 = vmatpush.msra.mxu0 0.0
  %1643 = vmatpush.msra.mxu0 %v1547
  %1644 = vmatpush.msra.mxu0 %v1545
  %1645 = vmatmul.f32.gmra.mxu0 %v1597
  %v1646 = vpop.f32.mrf.mxu0
  %v1647 = vadd.f32 0.0, %v1646
  %1648 = vmatmul.f32.gmra.mxu0 %v1599
  %v1649 = vpop.f32.mrf.mxu0
  %v1650 = vadd.f32 0.0, %v1649
  %1651 = vmatmul.f32.gmra.mxu0 %v1601
  %v1652 = vpop.f32.mrf.mxu0
  %v1653 = vadd.f32 0.0, %v1652
  %1654 = vmatmul.f32.gmra.mxu0 %v1603
  %v1655 = vpop.f32.mrf.mxu0
  %v1656 = vadd.f32 0.0, %v1655
  %1657 = vmatmul.f32.gmra.mxu0 %v1605
  %v1658 = vpop.f32.mrf.mxu0
  %v1659 = vadd.f32 0.0, %v1658
  %1660 = vmatmul.f32.gmra.mxu0 %v1607
  %v1661 = vpop.f32.mrf.mxu0
  %v1662 = vadd.f32 0.0, %v1661
  %1663 = vmatmul.f32.gmra.mxu0 %v1609
  %v1664 = vpop.f32.mrf.mxu0
  %v1665 = vadd.f32 0.0, %v1664
  %1666 = vmatmul.f32.gmra.mxu0 %v1611
  %v1667 = vpop.f32.mrf.mxu0
  %v1668 = vadd.f32 0.0, %v1667
  %1669 = vmatmul.f32.gmra.mxu0 %v1613
  %v1670 = vpop.f32.mrf.mxu0
  %v1671 = vadd.f32 0.0, %v1670
  %1672 = vmatmul.f32.gmra.mxu0 %v1615
  %v1673 = vpop.f32.mrf.mxu0
  %v1674 = vadd.f32 0.0, %v1673
  %1675 = vmatmul.f32.gmra.mxu0 %v1617
  %v1676 = vpop.f32.mrf.mxu0
  %v1677 = vadd.f32 0.0, %v1676
  %1678 = vmatmul.f32.gmra.mxu0 %v1619
  %v1679 = vpop.f32.mrf.mxu0
  %v1680 = vadd.f32 0.0, %v1679
  %1681 = vmatmul.f32.gmra.mxu0 %v1621
  %v1682 = vpop.f32.mrf.mxu0
  %v1683 = vadd.f32 0.0, %v1682
  %1684 = vmatmul.f32.gmra.mxu0 %v1623
  %v1685 = vpop.f32.mrf.mxu0
  %v1686 = vadd.f32 0.0, %v1685
  %1687 = vmatmul.f32.gmra.mxu0 %v1625
  %v1688 = vpop.f32.mrf.mxu0
  %v1689 = vadd.f32 0.0, %v1688
  %1690 = vmatmul.f32.gmra.mxu0 %v1627
  %v1691 = vpop.f32.mrf.mxu0
  %v1692 = vadd.f32 0.0, %v1691
  %1693 = vdwg.mxu0
  %1694 = vmatpush.msra.mxu0 0.0
  %1695 = vmatpush.msra.mxu0 0.0
  %1696 = vmatpush.msra.mxu0 0.0
  %1697 = vmatpush.msra.mxu0 0.0
  %1698 = vmatpush.msra.mxu0 0.0
  %1699 = vmatpush.msra.mxu0 0.0
  %1700 = vmatpush.msra.mxu0 0.0
  %1701 = vmatpush.msra.mxu0 0.0
  %1702 = vmatpush.msra.mxu0 0.0
  %1703 = vmatpush.msra.mxu0 0.0
  %1704 = vmatpush.msra.mxu0 0.0
  %1705 = vmatpush.msra.mxu0 0.0
  %1706 = vmatpush.msra.mxu0 0.0
  %1707 = vmatpush.msra.mxu0 0.0
  %1708 = vmatpush.msra.mxu0 %v1548
  %1709 = vmatpush.msra.mxu0 %v1546
  %1710 = vmatmul.f32.gmra.mxu0 %v1597
  %v1711 = vpop.f32.mrf.mxu0
  %v1712 = vadd.f32 0.0, %v1711
  %1713 = vmatmul.f32.gmra.mxu0 %v1599
  %v1714 = vpop.f32.mrf.mxu0
  %v1715 = vadd.f32 0.0, %v1714
  %1716 = vmatmul.f32.gmra.mxu0 %v1601
  %v1717 = vpop.f32.mrf.mxu0
  %v1718 = vadd.f32 0.0, %v1717
  %1719 = vmatmul.f32.gmra.mxu0 %v1603
  %v1720 = vpop.f32.mrf.mxu0
  %v1721 = vadd.f32 0.0, %v1720
  %1722 = vmatmul.f32.gmra.mxu0 %v1605
  %v1723 = vpop.f32.mrf.mxu0
  %v1724 = vadd.f32 0.0, %v1723
  %1725 = vmatmul.f32.gmra.mxu0 %v1607
  %v1726 = vpop.f32.mrf.mxu0
  %v1727 = vadd.f32 0.0, %v1726
  %1728 = vmatmul.f32.gmra.mxu0 %v1609
  %v1729 = vpop.f32.mrf.mxu0
  %v1730 = vadd.f32 0.0, %v1729
  %1731 = vmatmul.f32.gmra.mxu0 %v1611
  %v1732 = vpop.f32.mrf.mxu0
  %v1733 = vadd.f32 0.0, %v1732
  %1734 = vmatmul.f32.gmra.mxu0 %v1613
  %v1735 = vpop.f32.mrf.mxu0
  %v1736 = vadd.f32 0.0, %v1735
  %1737 = vmatmul.f32.gmra.mxu0 %v1615
  %v1738 = vpop.f32.mrf.mxu0
  %v1739 = vadd.f32 0.0, %v1738
  %1740 = vmatmul.f32.gmra.mxu0 %v1617
  %v1741 = vpop.f32.mrf.mxu0
  %v1742 = vadd.f32 0.0, %v1741
  %1743 = vmatmul.f32.gmra.mxu0 %v1619
  %v1744 = vpop.f32.mrf.mxu0
  %v1745 = vadd.f32 0.0, %v1744
  %1746 = vmatmul.f32.gmra.mxu0 %v1621
  %v1747 = vpop.f32.mrf.mxu0
  %v1748 = vadd.f32 0.0, %v1747
  %1749 = vmatmul.f32.gmra.mxu0 %v1623
  %v1750 = vpop.f32.mrf.mxu0
  %v1751 = vadd.f32 0.0, %v1750
  %1752 = vmatmul.f32.gmra.mxu0 %v1625
  %v1753 = vpop.f32.mrf.mxu0
  %v1754 = vadd.f32 0.0, %v1753
  %1755 = vmatmul.f32.gmra.mxu0 %v1627
  %v1756 = vpop.f32.mrf.mxu0
  %v1757 = vadd.f32 0.0, %v1756
  %1758 = vdwg.mxu0
  %v1759 = vmul.f32 %v1433, %v1647
  %v1760 = vmul.f32 %v1498, %v1712
  %v1761 = vmul.f32 %v1436, %v1650
  %v1762 = vmul.f32 %v1501, %v1715
  %v1763 = vmul.f32 %v1439, %v1653
  %v1764 = vmul.f32 %v1504, %v1718
  %v1765 = vmul.f32 %v1442, %v1656
  %v1766 = vmul.f32 %v1507, %v1721
  %v1767 = vmul.f32 %v1445, %v1659
  %v1768 = vmul.f32 %v1510, %v1724
  %v1769 = vmul.f32 %v1448, %v1662
  %v1770 = vmul.f32 %v1513, %v1727
  %v1771 = vmul.f32 %v1451, %v1665
  %v1772 = vmul.f32 %v1516, %v1730
  %v1773 = vmul.f32 %v1454, %v1668
  %v1774 = vmul.f32 %v1519, %v1733
  %v1775 = vmul.f32 %v1457, %v1671
  %v1776 = vmul.f32 %v1522, %v1736
  %v1777 = vmul.f32 %v1460, %v1674
  %v1778 = vmul.f32 %v1525, %v1739
  %v1779 = vmul.f32 %v1463, %v1677
  %v1780 = vmul.f32 %v1528, %v1742
  %v1781 = vmul.f32 %v1466, %v1680
  %v1782 = vmul.f32 %v1531, %v1745
  %v1783 = vmul.f32 %v1469, %v1683
  %v1784 = vmul.f32 %v1534, %v1748
  %v1785 = vmul.f32 %v1472, %v1686
  %v1786 = vmul.f32 %v1537, %v1751
  %v1787 = vmul.f32 %v1475, %v1689
  %v1788 = vmul.f32 %v1540, %v1754
  %v1789 = vmul.f32 %v1478, %v1692
  %v1790 = vmul.f32 %v1543, %v1757
  %1791 = vst [vmem:[%s9] sm:$0xff] %v1759
  %1792 = vst [vmem:[%s9 + $0x8] sm:$0xff] %v1760
  %1793 = vst [vmem:[%s9 + $0x10] sm:$0xff] %v1761
  %1794 = vst [vmem:[%s9 + $0x18] sm:$0xff] %v1762
  %1795 = vst [vmem:[%s9 + $0x20] sm:$0xff] %v1763
  %1796 = vst [vmem:[%s9 + $0x28] sm:$0xff] %v1764
  %1797 = vst [vmem:[%s9 + $0x30] sm:$0xff] %v1765
  %1798 = vst [vmem:[%s9 + $0x38] sm:$0xff] %v1766
  %1799 = vst [vmem:[%s9 + $0x40] sm:$0xff] %v1767
  %1800 = vst [vmem:[%s9 + $0x48] sm:$0xff] %v1768
  %1801 = vst [vmem:[%s9 + $0x50] sm:$0xff] %v1769
  %1802 = vst [vmem:[%s9 + $0x58] sm:$0xff] %v1770
  %1803 = vst [vmem:[%s9 + $0x60] sm:$0xff] %v1771
  %1804 = vst [vmem:[%s9 + $0x68] sm:$0xff] %v1772
  %1805 = vst [vmem:[%s9 + $0x70] sm:$0xff] %v1773
  %1806 = vst [vmem:[%s9 + $0x78] sm:$0xff] %v1774
  %1807 = vst [vmem:[%s9 + $0x80] sm:$0xff] %v1775
  %1808 = vst [vmem:[%s9 + $0x88] sm:$0xff] %v1776
  %1809 = vst [vmem:[%s9 + $0x90] sm:$0xff] %v1777
  %1810 = vst [vmem:[%s9 + $0x98] sm:$0xff] %v1778
  %1811 = vst [vmem:[%s9 + $0xa0] sm:$0xff] %v1779
  %1812 = vst [vmem:[%s9 + $0xa8] sm:$0xff] %v1780
  %1813 = vst [vmem:[%s9 + $0xb0] sm:$0xff] %v1781
  %1814 = vst [vmem:[%s9 + $0xb8] sm:$0xff] %v1782
  %1815 = vst [vmem:[%s9 + $0xc0] sm:$0xff] %v1783
  %1816 = vst [vmem:[%s9 + $0xc8] sm:$0xff] %v1784
  %1817 = vst [vmem:[%s9 + $0xd0] sm:$0xff] %v1785
  %1818 = vst [vmem:[%s9 + $0xd8] sm:$0xff] %v1786
  %1819 = vst [vmem:[%s9 + $0xe0] sm:$0xff] %v1787
  %1820 = vst [vmem:[%s9 + $0xe8] sm:$0xff] %v1788
  %1821 = vst [vmem:[%s9 + $0xf0] sm:$0xff] %v1789
  %1822 = vst [vmem:[%s9 + $0xf8] sm:$0xff] %v1790
  // Predicated region
  $region38: #{_lambda_.1} parent=0 // pred_check
    _
  $region39: #{_lambda_.1} parent=0 // pred_check_branch
    %1824 = sbr.rel (0) target = $region41
  $region40: #{_lambda_.1} parent=0 // pred_region
    _
  $region41: #{_lambda_.1} parent=0 // pred_fallthru
    _
  // Predicated region
  $region42: #{_lambda_.1} parent=0 // pred_check
    _
  $region43: #{_lambda_.1} parent=0 // pred_check_branch
    %1826 = sbr.rel (0) target = $region45
  $region44: #{_lambda_.1} parent=0 // pred_region
    _
  $region45: #{_lambda_.1} parent=0 // pred_fallthru
    _

</llo_original>
